<compile_context>
chip_gen: v7x
topology: tpu7x:2x2x1
jax: 0.10.0
libtpu: 0.0.40
codegen_flags: <defaults>
</compile_context>

<pallas_src>
import jax
import jax.numpy as jnp
from jax.experimental import pallas as pl
from jax.experimental.pallas import tpu as pltpu


# ---------------------------------------------------------------------------
# Weight reformatting (glue, runs once per call under jit on tiny tensors).
# PyTorch layouts in `params`:
#   w_side  (16, Ci, 3, 3), b_side (16,)
#   w_score (1, 16, 1, 1),  b_score (1,)
#   w_up    (16, 16, k, k)  w_up1 (1, 1, k, k)     (ConvTranspose2d, no bias)
# ---------------------------------------------------------------------------
def _prepare_weights(params, s):
    w_side = params["w_side"].astype(jnp.float32)
    b_side = params["b_side"].astype(jnp.float32)
    w_score = params["w_score"].reshape(1, 16).astype(jnp.float32)
    b_score = params["b_score"].reshape(1, 1).astype(jnp.float32)
    w_up = params["w_up"].astype(jnp.float32)
    w_up1 = params["w_up1"].astype(jnp.float32)
    k = w_up.shape[2]
    assert k == 2 * s, "phase decomposition assumes kernel_size == 2 * stride"
    ci = w_side.shape[1]

    # fused side_prep + score_dsn weight: (17, 9*Ci), columns ordered (kh, kw, ci);
    # row 16 = w_score composed through w_side (score_dsn rides in the same matmul)
    w1 = jnp.transpose(w_side, (0, 2, 3, 1)).reshape(16, 9 * ci)
    w1f = jnp.concatenate([w1, w_score @ w1], axis=0)                    # (17, 9Ci)
    b1f = jnp.concatenate(
        [b_side.reshape(16, 1), w_score @ b_side.reshape(16, 1) + b_score], axis=0)

    # phase/tap-decomposed ConvTranspose2d weights fused over the 4 taps:
    # (s*s*17, 4*17).  Block-diagonal per tap: rows o<16 <- upscale (16->16),
    # row o==16 <- upscale_ (1->1).  Column block m matches tap_scr row block m.
    tap_mats = []
    for mh in range(2):
        for mw in range(2):
            rows = []
            for rh in range(s):
                for rw in range(s):
                    kh = rh + s * (1 - mh)
                    kw = rw + s * (1 - mw)
                    blk = jnp.zeros((17, 17), jnp.float32)
                    blk = blk.at[:16, :16].set(w_up[:, :, kh, kw].T)     # [co, ci]
                    blk = blk.at[16, 16].set(w_up1[0, 0, kh, kw])
                    rows.append(blk)
            tap_mats.append(jnp.concatenate(rows, axis=0))               # (s*s*17, 17)
    w2f = jnp.concatenate(tap_mats, axis=1)                              # (s*s*17, 4*17)
    return w1f, b1f, w2f


# ---------------------------------------------------------------------------
# Full forward (matches dsam_score_dsn.forward).  x: (N, C, D, H, W) float32.
# Returns (side, side_out, side_out_tmp) in NCHW like the PyTorch module.
# ---------------------------------------------------------------------------
def dsam_score_dsn_forward(x, crop_h, crop_w, params, prev_layer):
    s = 2 ** prev_layer
    N, Ci, D, H, W = x.shape
    PADW = W + 2                      # padded row pitch (also the "extended" row pitch)
    EXT3 = H * PADW                   # extended length of side_prep / score output
    EXT2 = (H + 1) * PADW             # extended length of each ConvTranspose phase
    PADOFF = PADW + 1                 # lane offset of pixel (0,0) inside the padded scratch
    SCRW = PADOFF + EXT2              # pad-scratch width (covers all tap-shifted reads)
    LIN = (H + 3) * PADW              # flattened length of the padded input rows
    NPH = s * s                       # number of sub-pixel phases
    NTAP = 4                          # 2x2 taps (kernel_size == 2*stride)
    CH = 17                           # 16 side_prep channels + 1 fused score channel

    w1f, b1f, w2f = _prepare_weights(params, s)

    # ---- glue: channel-major + spatial zero-pad only (NO im2col duplication;
    #      the 9 conv taps are built in-kernel from this compact layout). ----
    xt = jnp.transpose(x, (0, 2, 1, 3, 4)).astype(jnp.float32)      # (N, D, Ci, H, W)
    xp = jnp.pad(xt, ((0, 0), (0, 0), (0, 0), (1, 2), (1, 1)))      # (N, D, Ci, H+3, W+2)
    xpf = xp.reshape(N, D, Ci, LIN)                                 # (N, D, Ci, LIN)

    taps = ((0, 0), (0, 1), (1, 0), (1, 1))

    def kernel(x_ref, w1_ref, b1_ref, w2_ref, up_ref, so_ref,
               pool_scr, col_scr, pad_scr, tap_scr):
        # ---- fused temporal average pool (AvgPool3d over full depth + squeeze),
        #      done on the compact (Ci, LIN) layout BEFORE im2col  [R1] ----
        acc = x_ref[0, 0]
        for d in range(1, D):
            acc = acc + x_ref[0, d]
        pool_scr[...] = acc * (1.0 / D)                             # (Ci, LIN)

        # ---- in-kernel im2col: 9 shifted ref-window copies -> (9*Ci, EXT3) [R1,R5] ----
        for kh in range(3):
            for kw in range(3):
                t = kh * 3 + kw
                off = kh * PADW + kw
                col_scr[t * Ci:(t + 1) * Ci, :] = pool_scr[:, off:off + EXT3]

        # ---- side_prep 3x3 conv + fused score_dsn: ONE K=9*Ci matmul,
        #      channel-major, single-pass bf16 MXU / f32 accumulate  [R3] ----
        ext = jnp.dot(w1_ref[...], col_scr[...],
                      preferred_element_type=jnp.float32) + b1_ref[...]   # (17, EXT3)

        # side_out_tmp (extended layout; wrapper strips the wrap columns)
        so_ref[0] = ext[16:17, :]

        # ---- zero the wrap columns (in-kernel iota mask [R8]) and write into the
        #      zero-bordered pad scratch; only the small border is re-zeroed  [R4] ----
        lane = jax.lax.broadcasted_iota(jnp.int32, (CH, EXT3), 1)
        ext_m = jnp.where(lane % PADW < W, ext, 0.0)
        pad_scr[:, :PADOFF] = jnp.zeros((CH, PADOFF), jnp.float32)
        pad_scr[:, PADOFF + EXT3:SCRW] = jnp.zeros((CH, SCRW - PADOFF - EXT3),
                                                   jnp.float32)
        pad_scr[:, PADOFF:PADOFF + EXT3] = ext_m

        # ---- stage the 4 shifted tap windows into a stacked (4*CH, EXT2) operand [R2,R5] ----
        for m, (mh, mw) in enumerate(taps):
            off = mh * PADW + mw
            tap_scr[m * CH:(m + 1) * CH, :] = pad_scr[:, off:off + EXT2]

        # ---- both ConvTranspose2d ops (all s*s phases, 16-ch + 1-ch heads):
        #      ONE K=4*CH matmul  [R2] ----
        up_ref[0] = jnp.dot(w2_ref[...], tap_scr[...],
                            preferred_element_type=jnp.float32)     # (NPH*CH, EXT2)

    # ---- explicit VMEM budget: double-buffered blocks + scratches  [R7] ----
    f32b = 4
    vmem_need = f32b * (
        2 * D * Ci * LIN                               # input block (double-buffered)
        + 2 * (NPH * CH * EXT2 + EXT3)                 # output blocks (double-buffered)
        + 2 * (CH * 9 * Ci + CH + NPH * CH * NTAP * CH)  # weight blocks
        + Ci * LIN + 9 * Ci * EXT3 + CH * SCRW + NTAP * CH * EXT2)  # scratches
    vmem_limit = int(min(64 << 20, max(16 << 20, 2 * vmem_need)))

    up_all, so_ext = pl.pallas_call(
        kernel,
        out_shape=(jax.ShapeDtypeStruct((N, NPH * CH, EXT2), jnp.float32),
                   jax.ShapeDtypeStruct((N, 1, EXT3), jnp.float32)),
        grid=(N,),
        in_specs=[
            pl.BlockSpec((1, D, Ci, LIN), lambda n: (n, 0, 0, 0)),
            pl.BlockSpec((CH, 9 * Ci), lambda n: (0, 0)),
            pl.BlockSpec((CH, 1), lambda n: (0, 0)),
            pl.BlockSpec((NPH * CH, NTAP * CH), lambda n: (0, 0)),
        ],
        out_specs=(pl.BlockSpec((1, NPH * CH, EXT2), lambda n: (n, 0, 0)),
                   pl.BlockSpec((1, 1, EXT3), lambda n: (n, 0, 0))),
        scratch_shapes=[
            pltpu.VMEM((Ci, LIN), jnp.float32),          # pooled (padded) input
            pltpu.VMEM((9 * Ci, EXT3), jnp.float32),     # im2col operand
            pltpu.VMEM((CH, SCRW), jnp.float32),         # zero-bordered side_prep
            pltpu.VMEM((NTAP * CH, EXT2), jnp.float32),  # stacked tap operand
        ],
        compiler_params=pltpu.CompilerParams(
            # keep a parallel axis of N>=2 so v7x megacore uses both TensorCores;
            # on single-TC v5e/v6e this only adds one ~0.35us grid step.
            dimension_semantics=("parallel",),
            vmem_limit_bytes=vmem_limit),
    )(xpf, w1f, b1f, w2f)

    # ---- glue: drop extended columns, interleave phases, center-crop, to NCHW ----
    Hq, Wq = H + 1, W + 1
    up5 = up_all.reshape(N, s, s, CH, Hq, PADW)[..., :Wq]           # (N,s,s,17,Hq,Wq)
    side_full = jnp.transpose(up5[:, :, :, :16], (0, 3, 4, 1, 5, 2)
                              ).reshape(N, 16, Hq * s, Wq * s)
    so_full = jnp.transpose(up5[:, :, :, 16], (0, 3, 1, 4, 2)
                            ).reshape(N, 1, Hq * s, Wq * s)

    def center_crop(a):
        Hf, Wf = a.shape[2], a.shape[3]
        oh, ow = (Hf - crop_h) // 2, (Wf - crop_w) // 2
        return a[:, :, oh:oh + crop_h, ow:ow + crop_w]

    side = center_crop(side_full)
    side_out = center_crop(so_full)
    side_out_tmp = so_ext.reshape(N, 1, H, PADW)[..., :W]
    return side, side_out, side_out_tmp


# ---------------------------------------------------------------------------
# Independent pure-JAX reference (PyTorch semantics, NCHW / OIHW weights).
# Computed at Precision.HIGHEST (near-exact f32) as ground truth.
# ---------------------------------------------------------------------------
def reference_forward(x, crop_h, crop_w, params, prev_layer):
    P = jax.lax.Precision.HIGHEST
    s = 2 ** prev_layer
    N, Ci, D, H, W = x.shape
    xm = jnp.mean(x.astype(jnp.float32), axis=2)                    # (N, Ci, H, W)
    xp = jnp.pad(xm, ((0, 0), (0, 0), (1, 1), (1, 1)))
    ws, bs = params["w_side"], params["b_side"]
    st = jnp.zeros((N, 16, H, W), jnp.float32) + bs[None, :, None, None]
    for kh in range(3):
        for kw in range(3):
            st = st + jnp.einsum("nchw,oc->nohw",
                                 xp[:, :, kh:kh + H, kw:kw + W],
                                 ws[:, :, kh, kw], precision=P)
    wsc = params["w_score"].reshape(1, 16)
    sot = jnp.einsum("nchw,oc->nohw", st, wsc, precision=P) \
        + params["b_score"][None, :, None, None]

    def conv_transpose(xin, w):          # xin (N,Ci,H,W), w (Ci,Co,k,k) PyTorch
        Nn, Cc, Hh, Ww = xin.shape
        _, Co, kk, _ = w.shape
        Ho, Wo = (Hh - 1) * s + kk, (Ww - 1) * s + kk
        out = jnp.zeros((Nn, Co, Ho, Wo), jnp.float32)
        for kh in range(kk):
            for kw in range(kk):
                contrib = jnp.einsum("nchw,cd->ndhw", xin, w[:, :, kh, kw],
                                     precision=P)
                out = out.at[:, :, kh:kh + (Hh - 1) * s + 1:s,
                             kw:kw + (Ww - 1) * s + 1:s].add(contrib)
        return out

    def crop(a):
        Hf, Wf = a.shape[2], a.shape[3]
        oh, ow = (Hf - crop_h) // 2, (Wf - crop_w) // 2
        return a[:, :, oh:oh + crop_h, ow:ow + crop_w]

    side = crop(conv_transpose(st, params["w_up"]))
    side_out = crop(conv_transpose(sot, params["w_up1"]))
    return side, side_out, sot


if __name__ == "__main__":
    # Small shapes consistent with the module: batch=2, prev_nfilters=4,
    # prev_nsamples=4 (depth fully averaged), spatial 16x16, prev_layer=1.
    N, Cin, D, H, W = 2, 4, 4, 16, 16
    prev_layer = 1
    s, k = 2 ** prev_layer, 2 ** (prev_layer + 1)
    crop_h = crop_w = 32                       # <= (H-1)*s + k = 34

    key = jax.random.PRNGKey(0)
    keys = jax.random.split(key, 7)
    x = jax.random.normal(keys[0], (N, Cin, D, H, W), jnp.float32)

    params = {
        "w_side": 0.1 * jax.random.normal(keys[1], (16, Cin, 3, 3), jnp.float32),
        "b_side": 0.1 * jax.random.normal(keys[2], (16,), jnp.float32),
        "w_score": 0.1 * jax.random.normal(keys[3], (1, 16, 1, 1), jnp.float32),
        "b_score": 0.1 * jax.random.normal(keys[4], (1,), jnp.float32),
        "w_up": 0.1 * jax.random.normal(keys[5], (16, 16, k, k), jnp.float32),
        "w_up1": 0.1 * jax.random.normal(keys[6], (1, 1, k, k), jnp.float32),
    }

    fwd = jax.jit(lambda xx, pp: dsam_score_dsn_forward(xx, crop_h, crop_w, pp,
                                                        prev_layer))
    side, side_out, side_out_tmp = fwd(x, params)
    jax.block_until_ready((side, side_out, side_out_tmp))

    r_side, r_side_out, r_sot = reference_forward(x, crop_h, crop_w, params,
                                                  prev_layer)
    assert side.shape == (N, 16, crop_h, crop_w)
    assert side_out.shape == (N, 1, crop_h, crop_w)
    assert side_out_tmp.shape == (N, 1, H, W)
    # Kernel matmuls run at DEFAULT precision (single-pass bf16 MXU, f32 acc)
    # per the perf review; reference is near-exact f32 (HIGHEST), so allow a
    # bf16-level tolerance.  Structural bugs would show errors ~O(0.3).
    TOL = 3e-2
    assert jnp.allclose(side, r_side, atol=TOL, rtol=TOL)
    assert jnp.allclose(side_out, r_side_out, atol=TOL, rtol=TOL)
    assert jnp.allclose(side_out_tmp, r_sot, atol=TOL, rtol=TOL)

    print("KERNEL_OK")
</pallas_src>

<mosaic_0001>
module attributes {stable_mosaic.version = 11 : i64} {
  func.func @kernel(%arg0: i32, %arg1: memref<1x4x4x342xf32, #tpu.memory_space<vmem>>, %arg2: memref<17x36xf32, #tpu.memory_space<vmem>>, %arg3: memref<17x1xf32, #tpu.memory_space<vmem>>, %arg4: memref<68x68xf32, #tpu.memory_space<vmem>>, %arg5: memref<1x68x306xf32, #tpu.memory_space<vmem>>, %arg6: memref<1x1x288xf32, #tpu.memory_space<vmem>>, %arg7: memref<4x342xf32, #tpu.memory_space<vmem>>, %arg8: memref<36x288xf32, #tpu.memory_space<vmem>>, %arg9: memref<17x325xf32, #tpu.memory_space<vmem>>, %arg10: memref<68x306xf32, #tpu.memory_space<vmem>>) attributes {dimension_semantics = [#tpu.dimension_semantics<parallel>], iteration_bounds = array<i64: 2>, scalar_prefetch = 0 : i64, scratch_operands = 4 : i64, tpu.core_type = #tpu.core_type<tc>, window_params = [{transform_indices = @transform_0, window_bounds = array<i64: 1, 4, 4, 342>}, {pipeline_mode = #tpu.pipeline_mode<synchronous>, transform_indices = @transform_1, window_bounds = array<i64: 17, 36>}, {pipeline_mode = #tpu.pipeline_mode<synchronous>, transform_indices = @transform_2, window_bounds = array<i64: 17, 1>}, {pipeline_mode = #tpu.pipeline_mode<synchronous>, transform_indices = @transform_3, window_bounds = array<i64: 68, 68>}, {transform_indices = @transform_4, window_bounds = array<i64: 1, 68, 306>}, {transform_indices = @transform_5, window_bounds = array<i64: 1, 1, 288>}]} {
    %c0 = arith.constant 0 : index
    %c0_0 = arith.constant 0 : index
    %c0_1 = arith.constant 0 : index
    %c0_2 = arith.constant 0 : index
    %0 = vector.load %arg1[%c0, %c0_0, %c0_1, %c0_2] : memref<1x4x4x342xf32, #tpu.memory_space<vmem>>, vector<1x1x4x342xf32>
    %1 = vector.shape_cast %0 : vector<1x1x4x342xf32> to vector<4x342xf32>
    %c0_3 = arith.constant 0 : index
    %c1 = arith.constant 1 : index
    %c0_4 = arith.constant 0 : index
    %c0_5 = arith.constant 0 : index
    %2 = vector.load %arg1[%c0_3, %c1, %c0_4, %c0_5] : memref<1x4x4x342xf32, #tpu.memory_space<vmem>>, vector<1x1x4x342xf32>
    %3 = vector.shape_cast %2 : vector<1x1x4x342xf32> to vector<4x342xf32>
    %4 = arith.addf %1, %3 : vector<4x342xf32>
    %c0_6 = arith.constant 0 : index
    %c2 = arith.constant 2 : index
    %c0_7 = arith.constant 0 : index
    %c0_8 = arith.constant 0 : index
    %5 = vector.load %arg1[%c0_6, %c2, %c0_7, %c0_8] : memref<1x4x4x342xf32, #tpu.memory_space<vmem>>, vector<1x1x4x342xf32>
    %6 = vector.shape_cast %5 : vector<1x1x4x342xf32> to vector<4x342xf32>
    %7 = arith.addf %4, %6 : vector<4x342xf32>
    %c0_9 = arith.constant 0 : index
    %c3 = arith.constant 3 : index
    %c0_10 = arith.constant 0 : index
    %c0_11 = arith.constant 0 : index
    %8 = vector.load %arg1[%c0_9, %c3, %c0_10, %c0_11] : memref<1x4x4x342xf32, #tpu.memory_space<vmem>>, vector<1x1x4x342xf32>
    %9 = vector.shape_cast %8 : vector<1x1x4x342xf32> to vector<4x342xf32>
    %10 = arith.addf %7, %9 : vector<4x342xf32>
    %cst = arith.constant 2.500000e-01 : f32
    %11 = vector.broadcast %cst : f32 to vector<4x342xf32>
    %12 = arith.mulf %10, %11 : vector<4x342xf32>
    %c0_12 = arith.constant 0 : index
    %c0_13 = arith.constant 0 : index
    %13 = vector.load %arg7[%c0_12, %c0_13] : memref<4x342xf32, #tpu.memory_space<vmem>>, vector<4x342xf32>
    tpu.vector_store %arg7[%c0_12, %c0_13], %12 {strides = array<i32>} : memref<4x342xf32, #tpu.memory_space<vmem>>, vector<4x342xf32>,
    %c0_14 = arith.constant 0 : index
    %c0_15 = arith.constant 0 : index
    %14 = vector.load %arg7[%c0_14, %c0_15] : memref<4x342xf32, #tpu.memory_space<vmem>>, vector<4x288xf32>
    %c0_16 = arith.constant 0 : index
    %c0_17 = arith.constant 0 : index
    %15 = vector.load %arg8[%c0_16, %c0_17] : memref<36x288xf32, #tpu.memory_space<vmem>>, vector<4x288xf32>
    tpu.vector_store %arg8[%c0_16, %c0_17], %14 {strides = array<i32>} : memref<36x288xf32, #tpu.memory_space<vmem>>, vector<4x288xf32>,
    %c0_18 = arith.constant 0 : index
    %c1_19 = arith.constant 1 : index
    %16 = vector.load %arg7[%c0_18, %c1_19] : memref<4x342xf32, #tpu.memory_space<vmem>>, vector<4x288xf32>
    %c4 = arith.constant 4 : index
    %c0_20 = arith.constant 0 : index
    %17 = vector.load %arg8[%c4, %c0_20] : memref<36x288xf32, #tpu.memory_space<vmem>>, vector<4x288xf32>
    tpu.vector_store %arg8[%c4, %c0_20], %16 {strides = array<i32>} : memref<36x288xf32, #tpu.memory_space<vmem>>, vector<4x288xf32>,
    %c0_21 = arith.constant 0 : index
    %c2_22 = arith.constant 2 : index
    %18 = vector.load %arg7[%c0_21, %c2_22] : memref<4x342xf32, #tpu.memory_space<vmem>>, vector<4x288xf32>
    %c8 = arith.constant 8 : index
    %c0_23 = arith.constant 0 : index
    %19 = vector.load %arg8[%c8, %c0_23] : memref<36x288xf32, #tpu.memory_space<vmem>>, vector<4x288xf32>
    tpu.vector_store %arg8[%c8, %c0_23], %18 {strides = array<i32>} : memref<36x288xf32, #tpu.memory_space<vmem>>, vector<4x288xf32>,
    %c0_24 = arith.constant 0 : index
    %c18 = arith.constant 18 : index
    %20 = vector.load %arg7[%c0_24, %c18] : memref<4x342xf32, #tpu.memory_space<vmem>>, vector<4x288xf32>
    %c12 = arith.constant 12 : index
    %c0_25 = arith.constant 0 : index
    %21 = vector.load %arg8[%c12, %c0_25] : memref<36x288xf32, #tpu.memory_space<vmem>>, vector<4x288xf32>
    tpu.vector_store %arg8[%c12, %c0_25], %20 {strides = array<i32>} : memref<36x288xf32, #tpu.memory_space<vmem>>, vector<4x288xf32>,
    %c0_26 = arith.constant 0 : index
    %c19 = arith.constant 19 : index
    %22 = vector.load %arg7[%c0_26, %c19] : memref<4x342xf32, #tpu.memory_space<vmem>>, vector<4x288xf32>
    %c16 = arith.constant 16 : index
    %c0_27 = arith.constant 0 : index
    %23 = vector.load %arg8[%c16, %c0_27] : memref<36x288xf32, #tpu.memory_space<vmem>>, vector<4x288xf32>
    tpu.vector_store %arg8[%c16, %c0_27], %22 {strides = array<i32>} : memref<36x288xf32, #tpu.memory_space<vmem>>, vector<4x288xf32>,
    %c0_28 = arith.constant 0 : index
    %c20 = arith.constant 20 : index
    %24 = vector.load %arg7[%c0_28, %c20] : memref<4x342xf32, #tpu.memory_space<vmem>>, vector<4x288xf32>
    %c20_29 = arith.constant 20 : index
    %c0_30 = arith.constant 0 : index
    %25 = vector.load %arg8[%c20_29, %c0_30] : memref<36x288xf32, #tpu.memory_space<vmem>>, vector<4x288xf32>
    tpu.vector_store %arg8[%c20_29, %c0_30], %24 {strides = array<i32>} : memref<36x288xf32, #tpu.memory_space<vmem>>, vector<4x288xf32>,
    %c0_31 = arith.constant 0 : index
    %c36 = arith.constant 36 : index
    %26 = vector.load %arg7[%c0_31, %c36] : memref<4x342xf32, #tpu.memory_space<vmem>>, vector<4x288xf32>
    %c24 = arith.constant 24 : index
    %c0_32 = arith.constant 0 : index
    %27 = vector.load %arg8[%c24, %c0_32] : memref<36x288xf32, #tpu.memory_space<vmem>>, vector<4x288xf32>
    tpu.vector_store %arg8[%c24, %c0_32], %26 {strides = array<i32>} : memref<36x288xf32, #tpu.memory_space<vmem>>, vector<4x288xf32>,
    %c0_33 = arith.constant 0 : index
    %c37 = arith.constant 37 : index
    %28 = vector.load %arg7[%c0_33, %c37] : memref<4x342xf32, #tpu.memory_space<vmem>>, vector<4x288xf32>
    %c28 = arith.constant 28 : index
    %c0_34 = arith.constant 0 : index
    %29 = vector.load %arg8[%c28, %c0_34] : memref<36x288xf32, #tpu.memory_space<vmem>>, vector<4x288xf32>
    tpu.vector_store %arg8[%c28, %c0_34], %28 {strides = array<i32>} : memref<36x288xf32, #tpu.memory_space<vmem>>, vector<4x288xf32>,
    %c0_35 = arith.constant 0 : index
    %c38 = arith.constant 38 : index
    %30 = vector.load %arg7[%c0_35, %c38] : memref<4x342xf32, #tpu.memory_space<vmem>>, vector<4x288xf32>
    %c32 = arith.constant 32 : index
    %c0_36 = arith.constant 0 : index
    %31 = vector.load %arg8[%c32, %c0_36] : memref<36x288xf32, #tpu.memory_space<vmem>>, vector<4x288xf32>
    tpu.vector_store %arg8[%c32, %c0_36], %30 {strides = array<i32>} : memref<36x288xf32, #tpu.memory_space<vmem>>, vector<4x288xf32>,
    %c0_37 = arith.constant 0 : index
    %c0_38 = arith.constant 0 : index
    %32 = vector.load %arg2[%c0_37, %c0_38] : memref<17x36xf32, #tpu.memory_space<vmem>>, vector<17x36xf32>
    %c0_39 = arith.constant 0 : index
    %c0_40 = arith.constant 0 : index
    %33 = vector.load %arg8[%c0_39, %c0_40] : memref<36x288xf32, #tpu.memory_space<vmem>>, vector<36x288xf32>
    %cst_41 = arith.constant dense<0.000000e+00> : vector<17x288xf32>
    %34 = tpu.matmul %32, %33, %cst_41 {dimension_numbers = #tpu.dot_dimension_numbers<[1], [0], [0], [1], [0, 0, 1, 1], [], []>} : vector<17x36xf32>, vector<36x288xf32>, vector<17x288xf32> -> vector<17x288xf32>
    %c0_42 = arith.constant 0 : index
    %c0_43 = arith.constant 0 : index
    %35 = vector.load %arg3[%c0_42, %c0_43] : memref<17x1xf32, #tpu.memory_space<vmem>>, vector<17x1xf32>
    %36 = vector.broadcast %35 : vector<17x1xf32> to vector<17x288xf32>
    %37 = arith.addf %34, %36 : vector<17x288xf32>
    %38 = vector.extract_strided_slice %37 {offsets = [16, 0], sizes = [1, 288], strides = [1, 1]} : vector<17x288xf32> to vector<1x288xf32>
    %c0_44 = arith.constant 0 : index
    %c0_45 = arith.constant 0 : index
    %c0_46 = arith.constant 0 : index
    %39 = vector.load %arg6[%c0_44, %c0_45, %c0_46] : memref<1x1x288xf32, #tpu.memory_space<vmem>>, vector<1x1x288xf32>
    %40 = vector.shape_cast %39 : vector<1x1x288xf32> to vector<1x288xf32>
    %41 = vector.shape_cast %38 : vector<1x288xf32> to vector<1x1x288xf32>
    tpu.vector_store %arg6[%c0_44, %c0_45, %c0_46], %41 {strides = array<i32>} : memref<1x1x288xf32, #tpu.memory_space<vmem>>, vector<1x1x288xf32>,
    %42 = tpu.iota {dimensions = array<i32: 1>} : vector<17x288xi32>
    %c18_i32 = arith.constant 18 : i32
    %c0_i32 = arith.constant 0 : i32
    %43 = arith.cmpi eq, %c18_i32, %c0_i32 : i32
    %c1_i32 = arith.constant 1 : i32
    %44 = arith.select %43, %c1_i32, %c18_i32 : i32
    %45 = vector.broadcast %44 : i32 to vector<17x288xi32>
    %46 = arith.remsi %42, %45 : vector<17x288xi32>
    %c0_i32_47 = arith.constant 0 : i32
    %47 = vector.broadcast %c0_i32_47 : i32 to vector<17x288xi32>
    %48 = arith.cmpi ne, %46, %47 : vector<17x288xi32>
    %c0_i32_48 = arith.constant 0 : i32
    %49 = vector.broadcast %c0_i32_48 : i32 to vector<17x288xi32>
    %50 = arith.cmpi slt, %46, %49 : vector<17x288xi32>
    %c0_i32_49 = arith.constant 0 : i32
    %51 = arith.cmpi slt, %44, %c0_i32_49 : i32
    %52 = vector.broadcast %51 : i1 to vector<17x288xi1>
    %53 = vector.broadcast %52 : vector<17x288xi1> to vector<17x288xi1>
    %54 = arith.xori %50, %53 : vector<17x288xi1>
    %55 = arith.andi %54, %48 : vector<17x288xi1>
    %56 = vector.broadcast %44 : i32 to vector<17x288xi32>
    %57 = arith.addi %46, %56 : vector<17x288xi32>
    %58 = arith.select %55, %57, %46 : vector<17x288xi1>, vector<17x288xi32>
    %c16_i32 = arith.constant 16 : i32
    %59 = vector.broadcast %c16_i32 : i32 to vector<17x288xi32>
    %60 = arith.cmpi slt, %58, %59 : vector<17x288xi32>
    %cst_50 = arith.constant 0.000000e+00 : f32
    %61 = vector.broadcast %cst_50 : f32 to vector<17x288xf32>
    %62 = arith.select %60, %37, %61 : vector<17x288xi1>, vector<17x288xf32>
    %cst_51 = arith.constant 0.000000e+00 : f32
    %63 = vector.broadcast %cst_51 : f32 to vector<17x19xf32>
    %c0_52 = arith.constant 0 : index
    %c0_53 = arith.constant 0 : index
    %64 = vector.load %arg9[%c0_52, %c0_53] : memref<17x325xf32, #tpu.memory_space<vmem>>, vector<17x19xf32>
    tpu.vector_store %arg9[%c0_52, %c0_53], %63 {strides = array<i32>} : memref<17x325xf32, #tpu.memory_space<vmem>>, vector<17x19xf32>,
    %cst_54 = arith.constant 0.000000e+00 : f32
    %65 = vector.broadcast %cst_54 : f32 to vector<17x18xf32>
    %c0_55 = arith.constant 0 : index
    %c307 = arith.constant 307 : index
    %66 = vector.load %arg9[%c0_55, %c307] : memref<17x325xf32, #tpu.memory_space<vmem>>, vector<17x18xf32>
    tpu.vector_store %arg9[%c0_55, %c307], %65 {strides = array<i32>} : memref<17x325xf32, #tpu.memory_space<vmem>>, vector<17x18xf32>,
    %c0_56 = arith.constant 0 : index
    %c19_57 = arith.constant 19 : index
    %67 = vector.load %arg9[%c0_56, %c19_57] : memref<17x325xf32, #tpu.memory_space<vmem>>, vector<17x288xf32>
    tpu.vector_store %arg9[%c0_56, %c19_57], %62 {strides = array<i32>} : memref<17x325xf32, #tpu.memory_space<vmem>>, vector<17x288xf32>,
    %c0_58 = arith.constant 0 : index
    %c0_59 = arith.constant 0 : index
    %68 = vector.load %arg9[%c0_58, %c0_59] : memref<17x325xf32, #tpu.memory_space<vmem>>, vector<17x306xf32>
    %c0_60 = arith.constant 0 : index
    %c0_61 = arith.constant 0 : index
    %69 = vector.load %arg10[%c0_60, %c0_61] : memref<68x306xf32, #tpu.memory_space<vmem>>, vector<17x306xf32>
    tpu.vector_store %arg10[%c0_60, %c0_61], %68 {strides = array<i32>} : memref<68x306xf32, #tpu.memory_space<vmem>>, vector<17x306xf32>,
    %c0_62 = arith.constant 0 : index
    %c1_63 = arith.constant 1 : index
    %70 = vector.load %arg9[%c0_62, %c1_63] : memref<17x325xf32, #tpu.memory_space<vmem>>, vector<17x306xf32>
    %c17 = arith.constant 17 : index
    %c0_64 = arith.constant 0 : index
    %71 = vector.load %arg10[%c17, %c0_64] : memref<68x306xf32, #tpu.memory_space<vmem>>, vector<17x306xf32>
    tpu.vector_store %arg10[%c17, %c0_64], %70 {strides = array<i32>} : memref<68x306xf32, #tpu.memory_space<vmem>>, vector<17x306xf32>,
    %c0_65 = arith.constant 0 : index
    %c18_66 = arith.constant 18 : index
    %72 = vector.load %arg9[%c0_65, %c18_66] : memref<17x325xf32, #tpu.memory_space<vmem>>, vector<17x306xf32>
    %c34 = arith.constant 34 : index
    %c0_67 = arith.constant 0 : index
    %73 = vector.load %arg10[%c34, %c0_67] : memref<68x306xf32, #tpu.memory_space<vmem>>, vector<17x306xf32>
    tpu.vector_store %arg10[%c34, %c0_67], %72 {strides = array<i32>} : memref<68x306xf32, #tpu.memory_space<vmem>>, vector<17x306xf32>,
    %c0_68 = arith.constant 0 : index
    %c19_69 = arith.constant 19 : index
    %74 = vector.load %arg9[%c0_68, %c19_69] : memref<17x325xf32, #tpu.memory_space<vmem>>, vector<17x306xf32>
    %c51 = arith.constant 51 : index
    %c0_70 = arith.constant 0 : index
    %75 = vector.load %arg10[%c51, %c0_70] : memref<68x306xf32, #tpu.memory_space<vmem>>, vector<17x306xf32>
    tpu.vector_store %arg10[%c51, %c0_70], %74 {strides = array<i32>} : memref<68x306xf32, #tpu.memory_space<vmem>>, vector<17x306xf32>,
    %c0_71 = arith.constant 0 : index
    %c0_72 = arith.constant 0 : index
    %76 = vector.load %arg4[%c0_71, %c0_72] : memref<68x68xf32, #tpu.memory_space<vmem>>, vector<68x68xf32>
    %c0_73 = arith.constant 0 : index
    %c0_74 = arith.constant 0 : index
    %77 = vector.load %arg10[%c0_73, %c0_74] : memref<68x306xf32, #tpu.memory_space<vmem>>, vector<68x306xf32>
    %cst_75 = arith.constant dense<0.000000e+00> : vector<68x306xf32>
    %78 = tpu.matmul %76, %77, %cst_75 {dimension_numbers = #tpu.dot_dimension_numbers<[1], [0], [0], [1], [0, 0, 1, 1], [], []>} : vector<68x68xf32>, vector<68x306xf32>, vector<68x306xf32> -> vector<68x306xf32>
    %c0_76 = arith.constant 0 : index
    %c0_77 = arith.constant 0 : index
    %c0_78 = arith.constant 0 : index
    %79 = vector.load %arg5[%c0_76, %c0_77, %c0_78] : memref<1x68x306xf32, #tpu.memory_space<vmem>>, vector<1x68x306xf32>
    %80 = vector.shape_cast %79 : vector<1x68x306xf32> to vector<68x306xf32>
    %81 = vector.shape_cast %78 : vector<68x306xf32> to vector<1x68x306xf32>
    tpu.vector_store %arg5[%c0_76, %c0_77, %c0_78], %81 {strides = array<i32>} : memref<1x68x306xf32, #tpu.memory_space<vmem>>, vector<1x68x306xf32>,
    return
  }
  func.func @transform_0(%arg0: i32) -> (i32, i32, i32, i32) {
    %c0_i32 = arith.constant 0 : i32
    %c0_i32_0 = arith.constant 0 : i32
    %c0_i32_1 = arith.constant 0 : i32
    %c0_i32_2 = arith.constant 0 : i32
    return %arg0, %c0_i32, %c0_i32_0, %c0_i32_1 : i32, i32, i32, i32
  }
  func.func @transform_1(%arg0: i32) -> (i32, i32) {
    %c0_i32 = arith.constant 0 : i32
    %c0_i32_0 = arith.constant 0 : i32
    %c0_i32_1 = arith.constant 0 : i32
    return %c0_i32, %c0_i32_0 : i32, i32
  }
  func.func @transform_2(%arg0: i32) -> (i32, i32) {
    %c0_i32 = arith.constant 0 : i32
    %c0_i32_0 = arith.constant 0 : i32
    %c0_i32_1 = arith.constant 0 : i32
    return %c0_i32, %c0_i32_0 : i32, i32
  }
  func.func @transform_3(%arg0: i32) -> (i32, i32) {
    %c0_i32 = arith.constant 0 : i32
    %c0_i32_0 = arith.constant 0 : i32
    %c0_i32_1 = arith.constant 0 : i32
    return %c0_i32, %c0_i32_0 : i32, i32
  }
  func.func @transform_4(%arg0: i32) -> (i32, i32, i32) {
    %c0_i32 = arith.constant 0 : i32
    %c0_i32_0 = arith.constant 0 : i32
    %c0_i32_1 = arith.constant 0 : i32
    return %arg0, %c0_i32, %c0_i32_0 : i32, i32, i32
  }
  func.func @transform_5(%arg0: i32) -> (i32, i32, i32) {
    %c0_i32 = arith.constant 0 : i32
    %c0_i32_0 = arith.constant 0 : i32
    %c0_i32_1 = arith.constant 0 : i32
    return %arg0, %c0_i32, %c0_i32_0 : i32, i32, i32
  }
}

</mosaic_0001>

<llo_original>
// kernel: _lambda_.1
$region0: #{_lambda_.1}
  #allocation0 [shape = 'u32[]', space=smem, size = 0x4, offset = 0x4, fixed_abs, tag = 'smem constant byte address 0x4 - core index']
  #allocation1 [shape = 'u32[144,128]{1,0:T(1,128)}', space=vmem, size = 0x12000, scoped, tag = 'internal scratch']
  #allocation2 [shape = 'f32[4,342]{1,0:T(4,128)}', space=vmem, size = 0x1800, scoped, tag = 'scratch operand']
  #allocation3 [shape = 'f32[36,288]{1,0:T(8,128)}', space=vmem, size = 0xf000, scoped, tag = 'scratch operand']
  #allocation4 [shape = 'f32[17,325]{1,0:T(8,128)}', space=vmem, size = 0x9000, scoped, tag = 'scratch operand']
  #allocation5 [shape = 'f32[68,306]{1,0:T(8,128)}', space=vmem, size = 0x1b000, scoped, tag = 'scratch operand']
  %s0 = inlined_call_operand.vmem [shape: f32[2,4,4,342], index: 0, kind: input, shape index: {}]
  %s1 = inlined_call_operand.vmem [shape: f32[17,36], index: 1, kind: input, shape index: {}]
  %s2 = inlined_call_operand.vmem [shape: f32[17,1], index: 2, kind: input, shape index: {}]
  %s3 = inlined_call_operand.vmem [shape: f32[68,68], index: 3, kind: input, shape index: {}]
  %s4 = inlined_call_operand.vmem [shape: f32[2,68,306], index: 4, kind: output, shape index: {0}]
  %s5 = inlined_call_operand.vmem [shape: f32[2,1,288], index: 5, kind: output, shape index: {1}]
  %6 = xla_tuple %s4, %s5
  %s7 = sld [smem:[#allocation0]]
  $region57: #{_lambda_.1} parent=0
    _
  %s9 = ssub.s32 1, %s7
  %s10 = scalar_select 0, %s9, %s7
  loop: start=0, step=1, limit=4
  $region2: #{_lambda_.1} parent=0 // loop_pre_header
    _
  $region3: #{_lambda_.1} parent=0 // loop_header
    %s12 = sphi 0, %s16
    %p13 = scmp.ge.s32.totalorder %s12, 4
    %s22 = sphi 0, %s24
    %s25 = sphi 0, %s22
    %s26 = sphi 0, %s25
    %s42 = sphi 0, %s26
    %s46 = sphi 0, %s46
    %s48 = sphi 0, %s46
    %s49 = sphi 0, %s48
    %s63 = sphi 0, %s49
    %s67 = sphi 0, %s67
    %s69 = sphi 0, %s67
    %s70 = sphi 0, %s69
    %s84 = sphi 0, %s70
    %s88 = sphi 0, %s88
    %s90 = sphi 0, %s88
    %s91 = sphi 0, %s90
    %s105 = sphi 0, %s91
    %s111 = sphi 0, %s113
    %s114 = sphi 0, %s111
    %s115 = sphi 0, %s114
    %s131 = sphi 0, %s115
    %s137 = sphi 0, %s139
    %s140 = sphi 0, %s137
    %s141 = sphi 0, %s140
    %s157 = sphi 0, %s141
  $region4: #{_lambda_.1} parent=0 // loop_header_branch
    %15 = sbr.rel (%p13) target = $region8
  $region5: #{_lambda_.1} parent=0 // loop_body
    %s17 = ssub.s32 %s12, 1
    %s18 = ssub.s32 %s12, 2
    %s19 = sadd.s32 %s12, 1
    %s20 = ssub.s32 %s12, %s19
    %p21 = scmp.eq.s32.totalorder %s20, 0
    %s23 = sadd.s32 %s22, 1
    %s24 = scalar_select %p21, %s22, %s23
    %p27 = pneg %p21
    %p28 = scmp.eq.s32.totalorder %s12, 1
    %p29 = por %p27, %p28
    %p30 = scmp.ne.s32.totalorder %s22, %s25
    %p31 = scmp.eq.s32.totalorder %s12, 0
    %p32 = por %p30, %p31
    %p33 = scmp.ne.s32.totalorder %s22, %s25
    %p34 = scmp.eq.s32.totalorder %s17, 1
    %p35 = por %p33, %p34
    %p36 = scmp.ne.s32.totalorder %s25, %s26
    %p37 = scmp.eq.s32.totalorder %s17, 0
    %p38 = por %p36, %p37
    %p39 = scmp.ne.s32.totalorder %s25, %s26
    %p40 = scmp.eq.s32.totalorder %s18, 1
    %p41 = por %p39, %p40
    %p43 = scmp.ne.s32.totalorder %s26, %s42
    %p44 = scmp.eq.s32.totalorder %s18, 0
    %p45 = por %p43, %p44
    %s47 = sadd.s32 %s46, 1
    %p50 = scmp.eq.s32.totalorder %s12, 1
    %p51 = scmp.ne.s32.totalorder %s46, %s48
    %p52 = scmp.eq.s32.totalorder %s12, 0
    %p53 = por %p51, %p52
    %p54 = scmp.ne.s32.totalorder %s46, %s48
    %p55 = scmp.eq.s32.totalorder %s17, 1
    %p56 = por %p54, %p55
    %p57 = scmp.ne.s32.totalorder %s48, %s49
    %p58 = scmp.eq.s32.totalorder %s17, 0
    %p59 = por %p57, %p58
    %p60 = scmp.ne.s32.totalorder %s48, %s49
    %p61 = scmp.eq.s32.totalorder %s18, 1
    %p62 = por %p60, %p61
    %p64 = scmp.ne.s32.totalorder %s49, %s63
    %p65 = scmp.eq.s32.totalorder %s18, 0
    %p66 = por %p64, %p65
    %s68 = sadd.s32 %s67, 1
    %p71 = scmp.eq.s32.totalorder %s12, 1
    %p72 = scmp.ne.s32.totalorder %s67, %s69
    %p73 = scmp.eq.s32.totalorder %s12, 0
    %p74 = por %p72, %p73
    %p75 = scmp.ne.s32.totalorder %s67, %s69
    %p76 = scmp.eq.s32.totalorder %s17, 1
    %p77 = por %p75, %p76
    %p78 = scmp.ne.s32.totalorder %s69, %s70
    %p79 = scmp.eq.s32.totalorder %s17, 0
    %p80 = por %p78, %p79
    %p81 = scmp.ne.s32.totalorder %s69, %s70
    %p82 = scmp.eq.s32.totalorder %s18, 1
    %p83 = por %p81, %p82
    %p85 = scmp.ne.s32.totalorder %s70, %s84
    %p86 = scmp.eq.s32.totalorder %s18, 0
    %p87 = por %p85, %p86
    %s89 = sadd.s32 %s88, 1
    %p92 = scmp.eq.s32.totalorder %s12, 1
    %p93 = scmp.ne.s32.totalorder %s88, %s90
    %p94 = scmp.eq.s32.totalorder %s12, 0
    %p95 = por %p93, %p94
    %p96 = scmp.ne.s32.totalorder %s88, %s90
    %p97 = scmp.eq.s32.totalorder %s17, 1
    %p98 = por %p96, %p97
    %p99 = scmp.ne.s32.totalorder %s90, %s91
    %p100 = scmp.eq.s32.totalorder %s17, 0
    %p101 = por %p99, %p100
    %p102 = scmp.ne.s32.totalorder %s90, %s91
    %p103 = scmp.eq.s32.totalorder %s18, 1
    %p104 = por %p102, %p103
    %p106 = scmp.ne.s32.totalorder %s91, %s105
    %p107 = scmp.eq.s32.totalorder %s18, 0
    %p108 = por %p106, %p107
    %s109 = ssub.s32 %s12, %s19
    %p110 = scmp.eq.s32.totalorder %s109, 0
    %s112 = sadd.s32 %s111, 1
    %s113 = scalar_select %p110, %s111, %s112
    %p116 = pneg %p110
    %p117 = scmp.eq.s32.totalorder %s12, 1
    %p118 = por %p116, %p117
    %p119 = scmp.ne.s32.totalorder %s111, %s114
    %p120 = scmp.eq.s32.totalorder %s12, 0
    %p121 = por %p119, %p120
    %p122 = scmp.ne.s32.totalorder %s111, %s114
    %p123 = scmp.eq.s32.totalorder %s17, 1
    %p124 = por %p122, %p123
    %p125 = scmp.ne.s32.totalorder %s114, %s115
    %p126 = scmp.eq.s32.totalorder %s17, 0
    %p127 = por %p125, %p126
    %p128 = scmp.ne.s32.totalorder %s114, %s115
    %p129 = scmp.eq.s32.totalorder %s18, 1
    %p130 = por %p128, %p129
    %p132 = scmp.ne.s32.totalorder %s115, %s131
    %p133 = scmp.eq.s32.totalorder %s18, 0
    %p134 = por %p132, %p133
    %s135 = ssub.s32 %s12, %s19
    %p136 = scmp.eq.s32.totalorder %s135, 0
    %s138 = sadd.s32 %s137, 1
    %s139 = scalar_select %p136, %s137, %s138
    %p142 = pneg %p136
    %p143 = scmp.eq.s32.totalorder %s12, 1
    %p144 = por %p142, %p143
    %p145 = scmp.ne.s32.totalorder %s137, %s140
    %p146 = scmp.eq.s32.totalorder %s12, 0
    %p147 = por %p145, %p146
    %p148 = scmp.ne.s32.totalorder %s137, %s140
    %p149 = scmp.eq.s32.totalorder %s17, 1
    %p150 = por %p148, %p149
    %p151 = scmp.ne.s32.totalorder %s140, %s141
    %p152 = scmp.eq.s32.totalorder %s17, 0
    %p153 = por %p151, %p152
    %p154 = scmp.ne.s32.totalorder %s140, %s141
    %p155 = scmp.eq.s32.totalorder %s18, 1
    %p156 = por %p154, %p155
    %p158 = scmp.ne.s32.totalorder %s141, %s157
    %p159 = scmp.eq.s32.totalorder %s18, 0
    %p160 = por %p158, %p159
    %p161 = scmp.le.s32.totalorder 1, %s12
    %p162 = scmp.lt.s32.totalorder %s12, 3
    %p163 = pnand %p161, %p162
    %p164 = pneg %p163
    // Predicated region
    $region9: #{_lambda_.1} parent=5 // pred_check
      _
    $region10: #{_lambda_.1} parent=5 // pred_check_branch
      %166 = sbr.rel (%p163) target = $region12
    $region11: #{_lambda_.1} parent=5 // pred_region
      %s167 = ssub.s32 %s12, 1
      // Predicated region
      $region13: #{_lambda_.1} parent=11 // pred_check
        %p168 = pneg %p59
      $region14: #{_lambda_.1} parent=11 // pred_check_branch
        %170 = sbr.rel (%p168) target = $region16
      $region15: #{_lambda_.1} parent=11 // pred_region
        _
      $region16: #{_lambda_.1} parent=11 // pred_fallthru
        _
      // Predicated region
      $region17: #{_lambda_.1} parent=11 // pred_check
        %p171 = pneg %p80
      $region18: #{_lambda_.1} parent=11 // pred_check_branch
        %173 = sbr.rel (%p171) target = $region20
      $region19: #{_lambda_.1} parent=11 // pred_region
        _
      $region20: #{_lambda_.1} parent=11 // pred_fallthru
        _
      // Predicated region
      $region21: #{_lambda_.1} parent=11 // pred_check
        %p174 = pneg %p101
      $region22: #{_lambda_.1} parent=11 // pred_check_branch
        %176 = sbr.rel (%p174) target = $region24
      $region23: #{_lambda_.1} parent=11 // pred_region
        _
      $region24: #{_lambda_.1} parent=11 // pred_fallthru
        _
    $region12: #{_lambda_.1} parent=5 // pred_fallthru
      _
    %p177 = scmp.lt.s32.totalorder %s12, 2
    // Predicated region
    $region25: #{_lambda_.1} parent=5 // pred_check
      %p178 = pneg %p177
    $region26: #{_lambda_.1} parent=5 // pred_check_branch
      %180 = sbr.rel (%p178) target = $region28
    $region27: #{_lambda_.1} parent=5 // pred_region
      // Predicated region
      $region29: #{_lambda_.1} parent=27 // pred_check
        %p181 = pneg %p32
      $region30: #{_lambda_.1} parent=27 // pred_check_branch
        %183 = sbr.rel (%p181) target = $region32
      $region31: #{_lambda_.1} parent=27 // pred_region
        %p184 = scmp.lt.s32.totalorder %s12, 1
        %s185 = scalar_select %p184, %s12, 1
        %s186 = smul.addr %s185, 12
        %s187 = smul.addr %s186, 4
        %s188 = scalar_lea.vmem %s0, %s187
      $region32: #{_lambda_.1} parent=27 // pred_fallthru
        _
    $region28: #{_lambda_.1} parent=5 // pred_fallthru
      _
    %p189 = scmp.le.s32.totalorder 1, %s12
    %p190 = scmp.lt.s32.totalorder %s12, 3
    %p191 = pnand %p189, %p190
    %p192 = pneg %p191
    // Predicated region
    $region33: #{_lambda_.1} parent=5 // pred_check
      _
    $region34: #{_lambda_.1} parent=5 // pred_check_branch
      %194 = sbr.rel (%p191) target = $region36
    $region35: #{_lambda_.1} parent=5 // pred_region
      %s195 = ssub.s32 %s12, 1
      %p196 = scmp.lt.s32.totalorder %s17, 1
      %s197 = scalar_select %p196, %s17, 1
      %s198 = smul.addr %s197, 12
      %s199 = smul.addr %s198, 4
      %s200 = scalar_lea.vmem %s0, %s199
      %p201 = pneg %p38
      %p202 = pneg %p35
      %p203 = pneg %p59
      %p204 = pneg %p56
      %p205 = pneg %p80
      %p206 = pneg %p77
      %p207 = pneg %p101
      %p208 = pneg %p98
      %p209 = pneg %p127
      %p210 = pneg %p124
      %p211 = scmp.lt.s32.totalorder %s17, 1
      %s212 = scalar_select %p211, %s17, 1
      %s213 = smul.addr %s212, 27
      %s214 = smul.addr %s213, 8
      %s215 = scalar_lea.vmem %s4, %s214
      %p216 = pneg %p153
      %p217 = pneg %p150
      %p218 = scmp.lt.s32.totalorder %s17, 1
      %s219 = scalar_select %p218, %s17, 1
      %s220 = smul.addr %s219, 3
      %s221 = scalar_lea.vmem %s5, %s220
      %p222 = scmp.lt.s32.totalorder %s17, 1
      %s223 = scalar_select %p222, %s17, 1
      %s224 = smul.addr %s223, 12
      %s225 = smul.addr %s224, 4
      %s226 = scalar_lea.vmem %s0, %s225
      %p227 = scmp.lt.s32.totalorder %s17, 1
      %s228 = scalar_select %p227, %s17, 1
      %s229 = smul.addr %s228, 27
      %s230 = smul.addr %s229, 8
      %s231 = scalar_lea.vmem %s4, %s230
      %p232 = scmp.lt.s32.totalorder %s17, 1
      %s233 = scalar_select %p232, %s17, 1
      %s234 = smul.addr %s233, 3
      %s235 = scalar_lea.vmem %s5, %s234
      %v236 = vld [vmem:[%s226] sm:$0xff]
      %v237 = vld [vmem:[%s226 + $0x8] sm:$0xf]
      %s238 = scalar_lea.vmem %s226, 12
      %v239 = vld [vmem:[%s238] sm:$0xff]
      %v240 = vld [vmem:[%s238 + $0x8] sm:$0xf]
      %v241 = vadd.f32 %v236, %v239
      %v242 = vadd.f32 %v237, %v240
      %s243 = scalar_lea.vmem %s226, 24
      %v244 = vld [vmem:[%s243] sm:$0xff]
      %v245 = vld [vmem:[%s243 + $0x8] sm:$0xf]
      %v246 = vadd.f32 %v241, %v244
      %v247 = vadd.f32 %v242, %v245
      %s248 = scalar_lea.vmem %s226, 36
      %v249 = vld [vmem:[%s248] sm:$0xff]
      %v250 = vld [vmem:[%s248 + $0x8] sm:$0xf]
      %v251 = vadd.f32 %v246, %v249
      %v252 = vadd.f32 %v247, %v250
      %v253 = vmul.f32 %v251, 0.25
      %v254 = vmul.f32 %v252, 0.25
      %255 = vst [vmem:[#allocation2] sm:$0xff] %v253
      %vm256 = vcmask 699392
      %257 = vst.msk [vmem:[#allocation2 + $0x8] sm:$0xf] %vm256, %v254
      %v258 = vld [vmem:[#allocation2] sm:$0xff]
      %v259 = vld [vmem:[#allocation2 + $0x8] sm:$0xf]
      %v261 = vcombine.high %v258, %v258
      %263 = vst [vmem:[#allocation3] sm:$0xf] %v258
      %264 = vst [vmem:[#allocation3 + $0x8] sm:$0xf] %v261
      %vm265 = vcmask 257024
      %266 = vst.msk [vmem:[#allocation3 + $0x10] sm:$0xf] %vm265, %v259
      %v267 = vld [vmem:[#allocation2] sm:$0xff]
      %v268 = vld [vmem:[#allocation2 + $0x8] sm:$0xf]
      %v271 = vcombine.low %v267, %v267
      %v272 = vcombine.low %v268, %v268
      %273 = vrot.lane.b32.xlu0 %v271, 127
      %v274 = vpop.permute.xlu0 %273
      %275 = vrot.lane.b32.xlu0 %v267, 127
      %v276 = vpop.permute.xlu0 %275
      %277 = vrot.lane.b32.xlu0 %v272, 127
      %v278 = vpop.permute.xlu0 %277
      %vm279 = vcmask 1039360
      %v280 = vsel %vm279, %v274, %v276
      %v281 = vsel %vm279, %v276, %v278
      %285 = vst [vmem:[#allocation3] sm:$0xf0] %v280
      %286 = vst [vmem:[#allocation3 + $0x8] sm:$0xf0] %v281
      %vm287 = vcmask 261124
      %288 = vst.msk [vmem:[#allocation3 + $0x10] sm:$0xf0] %vm287, %v278
      %v289 = vld [vmem:[#allocation2] sm:$0xff]
      %v290 = vld [vmem:[#allocation2 + $0x8] sm:$0xf]
      %v293 = vcombine.high %v289, %v289
      %294 = vrot.lane.b32.xlu0 %v289, 126
      %v295 = vpop.permute.xlu0 %294
      %296 = vrot.lane.b32.xlu0 %v293, 126
      %v297 = vpop.permute.xlu0 %296
      %298 = vrot.lane.b32.xlu0 %v290, 126
      %v299 = vpop.permute.xlu0 %298
      %vm300 = vcmask 1031168
      %v301 = vsel %vm300, %v295, %v297
      %v302 = vsel %vm300, %v297, %v299
      %306 = vst [vmem:[#allocation3 + $0x18] sm:$0xf] %v301
      %307 = vst [vmem:[#allocation3 + $0x20] sm:$0xf] %v302
      %308 = vst.msk [vmem:[#allocation3 + $0x28] sm:$0xf] %vm265, %v299
      %v309 = vld [vmem:[#allocation2] sm:$0xff]
      %v310 = vld [vmem:[#allocation2 + $0x8] sm:$0xf]
      %v313 = vcombine.low %v309, %v309
      %v314 = vcombine.low %v310, %v310
      %315 = vrot.lane.b32.xlu0 %v313, 110
      %v316 = vpop.permute.xlu0 %315
      %317 = vrot.lane.b32.xlu0 %v309, 110
      %v318 = vpop.permute.xlu0 %317
      %319 = vrot.lane.b32.xlu0 %v314, 110
      %v320 = vpop.permute.xlu0 %319
      %vm321 = vcmask 900096
      %v322 = vsel %vm321, %v316, %v318
      %v323 = vsel %vm321, %v318, %v320
      %327 = vst [vmem:[#allocation3 + $0x18] sm:$0xf0] %v322
      %328 = vst [vmem:[#allocation3 + $0x20] sm:$0xf0] %v323
      %329 = vst.msk [vmem:[#allocation3 + $0x28] sm:$0xf0] %vm287, %v320
      %v330 = vld [vmem:[#allocation2] sm:$0xff]
      %v331 = vld [vmem:[#allocation2 + $0x8] sm:$0xf]
      %v334 = vcombine.high %v330, %v330
      %335 = vrot.lane.b32.xlu0 %v330, 109
      %v336 = vpop.permute.xlu0 %335
      %337 = vrot.lane.b32.xlu0 %v334, 109
      %v338 = vpop.permute.xlu0 %337
      %339 = vrot.lane.b32.xlu0 %v331, 109
      %v340 = vpop.permute.xlu0 %339
      %vm341 = vcmask 891904
      %v342 = vsel %vm341, %v336, %v338
      %v343 = vsel %vm341, %v338, %v340
      %347 = vst [vmem:[#allocation3 + $0x30] sm:$0xf] %v342
      %348 = vst [vmem:[#allocation3 + $0x38] sm:$0xf] %v343
      %349 = vst.msk [vmem:[#allocation3 + $0x40] sm:$0xf] %vm265, %v340
      %v350 = vld [vmem:[#allocation2] sm:$0xff]
      %v351 = vld [vmem:[#allocation2 + $0x8] sm:$0xf]
      %v354 = vcombine.low %v350, %v350
      %v355 = vcombine.low %v351, %v351
      %356 = vrot.lane.b32.xlu0 %v354, 108
      %v357 = vpop.permute.xlu0 %356
      %358 = vrot.lane.b32.xlu0 %v350, 108
      %v359 = vpop.permute.xlu0 %358
      %360 = vrot.lane.b32.xlu0 %v355, 108
      %v361 = vpop.permute.xlu0 %360
      %vm362 = vcmask 883712
      %v363 = vsel %vm362, %v357, %v359
      %v364 = vsel %vm362, %v359, %v361
      %368 = vst [vmem:[#allocation3 + $0x30] sm:$0xf0] %v363
      %369 = vst [vmem:[#allocation3 + $0x38] sm:$0xf0] %v364
      %370 = vst.msk [vmem:[#allocation3 + $0x40] sm:$0xf0] %vm287, %v361
      %v371 = vld [vmem:[#allocation2] sm:$0xff]
      %v372 = vld [vmem:[#allocation2 + $0x8] sm:$0xf]
      %v375 = vcombine.high %v371, %v371
      %376 = vrot.lane.b32.xlu0 %v371, 92
      %v377 = vpop.permute.xlu0 %376
      %378 = vrot.lane.b32.xlu0 %v375, 92
      %v379 = vpop.permute.xlu0 %378
      %380 = vrot.lane.b32.xlu0 %v372, 92
      %v381 = vpop.permute.xlu0 %380
      %vm382 = vcmask 752640
      %v383 = vsel %vm382, %v377, %v379
      %v384 = vsel %vm382, %v379, %v381
      %388 = vst [vmem:[#allocation3 + $0x48] sm:$0xf] %v383
      %389 = vst [vmem:[#allocation3 + $0x50] sm:$0xf] %v384
      %390 = vst.msk [vmem:[#allocation3 + $0x58] sm:$0xf] %vm265, %v381
      %v391 = vld [vmem:[#allocation2] sm:$0xff]
      %v392 = vld [vmem:[#allocation2 + $0x8] sm:$0xf]
      %v395 = vcombine.low %v391, %v391
      %v396 = vcombine.low %v392, %v392
      %397 = vrot.lane.b32.xlu0 %v395, 91
      %v398 = vpop.permute.xlu0 %397
      %399 = vrot.lane.b32.xlu0 %v391, 91
      %v400 = vpop.permute.xlu0 %399
      %401 = vrot.lane.b32.xlu0 %v396, 91
      %v402 = vpop.permute.xlu0 %401
      %vm403 = vcmask 744448
      %v404 = vsel %vm403, %v398, %v400
      %v405 = vsel %vm403, %v400, %v402
      %409 = vst [vmem:[#allocation3 + $0x48] sm:$0xf0] %v404
      %410 = vst [vmem:[#allocation3 + $0x50] sm:$0xf0] %v405
      %411 = vst.msk [vmem:[#allocation3 + $0x58] sm:$0xf0] %vm287, %v402
      %v412 = vld [vmem:[#allocation2] sm:$0xff]
      %v413 = vld [vmem:[#allocation2 + $0x8] sm:$0xf]
      %v416 = vcombine.high %v412, %v412
      %417 = vrot.lane.b32.xlu0 %v412, 90
      %v418 = vpop.permute.xlu0 %417
      %419 = vrot.lane.b32.xlu0 %v416, 90
      %v420 = vpop.permute.xlu0 %419
      %421 = vrot.lane.b32.xlu0 %v413, 90
      %v422 = vpop.permute.xlu0 %421
      %vm423 = vcmask 736256
      %v424 = vsel %vm423, %v418, %v420
      %v425 = vsel %vm423, %v420, %v422
      %429 = vst [vmem:[#allocation3 + $0x60] sm:$0xf] %v424
      %430 = vst [vmem:[#allocation3 + $0x68] sm:$0xf] %v425
      %431 = vst.msk [vmem:[#allocation3 + $0x70] sm:$0xf] %vm265, %v422
      %v432 = vld [vmem:[%s1] sm:$0xff]
      %v433 = vld [vmem:[%s1 + $0x8] sm:$0xff]
      %v434 = vld [vmem:[%s1 + $0x10] sm:$0x1]
      %v435 = vld [vmem:[#allocation3] sm:$0xff]
      %v436 = vld [vmem:[#allocation3 + $0x8] sm:$0xff]
      %v437 = vld [vmem:[#allocation3 + $0x10] sm:$0xff]
      %v438 = vld [vmem:[#allocation3 + $0x18] sm:$0xff]
      %v439 = vld [vmem:[#allocation3 + $0x20] sm:$0xff]
      %v440 = vld [vmem:[#allocation3 + $0x28] sm:$0xff]
      %v441 = vld [vmem:[#allocation3 + $0x30] sm:$0xff]
      %v442 = vld [vmem:[#allocation3 + $0x38] sm:$0xff]
      %v443 = vld [vmem:[#allocation3 + $0x40] sm:$0xff]
      %v444 = vld [vmem:[#allocation3 + $0x48] sm:$0xff]
      %v445 = vld [vmem:[#allocation3 + $0x50] sm:$0xff]
      %v446 = vld [vmem:[#allocation3 + $0x58] sm:$0xff]
      %v447 = vld [vmem:[#allocation3 + $0x60] sm:$0xf]
      %v448 = vld [vmem:[#allocation3 + $0x68] sm:$0xf]
      %v449 = vld [vmem:[#allocation3 + $0x70] sm:$0xf]
      %v450 = vld [vmem:[%s2] sm:$0xff]
      %v451 = vld [vmem:[%s2 + $0x8] sm:$0xff]
      %v452 = vld [vmem:[%s2 + $0x10] sm:$0x1]
      %454 = vset.pattern.permute.xlu0 0
      %455 = vperm.xlu0 %454, %v450
      %v456 = vpop.permute.xlu0 %455
      %459 = vset.pattern.permute.xlu0 0
      %460 = vperm.xlu0 %459, %v451
      %v461 = vpop.permute.xlu0 %460
      %464 = vset.pattern.permute.xlu0 0
      %465 = vperm.xlu0 %464, %v452
      %v466 = vpop.permute.xlu0 %465
      %vm468 = vcmask 293888
      %v470 = vsel %vm468, %v432, 0
      %v473 = vsel %vm468, %v433, 0
      %v476 = vsel %vm468, %v434, 0
      %vm478 = vcmask 1043456
      %v480 = vsel %vm478, %v447, 0
      %v483 = vsel %vm478, %v448, 0
      %v486 = vsel %vm478, %v449, 0
      %488 = vmatprep.subr.mxu0 %v436
      %489 = vmatpush1.msra.mxu0 %v435
      %490 = vmatprep.subr.mxu0 %v439
      %491 = vmatpush1.msra.mxu0 %v438
      %492 = vmatprep.subr.mxu0 %v442
      %493 = vmatpush1.msra.mxu0 %v441
      %494 = vmatprep.subr.mxu0 %v445
      %495 = vmatpush1.msra.mxu0 %v444
      %496 = vmatprep.subr.mxu0 %v483
      %497 = vmatpush1.msra.mxu0 %v480
      %498 = vmatprep.subr.mxu0 0.0
      %499 = vmatpush1.msra.mxu0 0.0
      %500 = vmatprep.subr.mxu0 0.0
      %501 = vmatpush1.msra.mxu0 0.0
      %502 = vmatprep.subr.mxu0 0.0
      %503 = vmatpush1.msra.mxu0 0.0
      %504 = vmatprep.subr.mxu0 0.0
      %505 = vmatpush1.msra.mxu0 0.0
      %506 = vmatprep.subr.mxu0 0.0
      %507 = vmatpush1.msra.mxu0 0.0
      %508 = vmatprep.subr.mxu0 0.0
      %509 = vmatpush1.msra.mxu0 0.0
      %510 = vmatprep.subr.mxu0 0.0
      %511 = vmatpush1.msra.mxu0 0.0
      %512 = vmatprep.subr.mxu0 0.0
      %513 = vmatpush1.msra.mxu0 0.0
      %514 = vmatprep.subr.mxu0 0.0
      %515 = vmatpush1.msra.mxu0 0.0
      %516 = vmatprep.subr.mxu0 0.0
      %517 = vmatpush1.msra.mxu0 0.0
      %518 = vmatprep.subr.mxu0 0.0
      %519 = vmatpush1.msra.mxu0 0.0
      %520 = vmatprep.subr.mxu0 0.0
      %521 = vmatpush1.msra.mxu0 0.0
      %522 = vmatprep.subr.mxu0 0.0
      %523 = vmatpush1.msra.mxu0 0.0
      %524 = vmatprep.subr.mxu0 0.0
      %525 = vmatpush1.msra.mxu0 0.0
      %526 = vmatprep.subr.mxu0 0.0
      %527 = vmatpush1.msra.mxu0 0.0
      %528 = vmatprep.subr.mxu0 0.0
      %529 = vmatpush1.msra.mxu0 0.0
      %530 = vmatprep.subr.mxu0 0.0
      %531 = vmatpush1.msra.mxu0 0.0
      %532 = vmatprep.subr.mxu0 0.0
      %533 = vmatpush1.msra.mxu0 0.0
      %534 = vmatprep.subr.mxu0 0.0
      %535 = vmatpush1.msra.mxu0 0.0
      %536 = vmatprep.subr.mxu0 0.0
      %537 = vmatpush1.msra.mxu0 0.0
      %538 = vmatprep.subr.mxu0 0.0
      %539 = vmatpush1.msra.mxu0 0.0
      %540 = vmatprep.subr.mxu0 0.0
      %541 = vmatpush1.msra.mxu0 0.0
      %542 = vmatprep.subr.mxu0 0.0
      %543 = vmatpush1.msra.mxu0 0.0
      %544 = vmatprep.subr.mxu0 0.0
      %545 = vmatpush1.msra.mxu0 0.0
      %546 = vmatprep.subr.mxu0 0.0
      %547 = vmatpush1.msra.mxu0 0.0
      %548 = vmatprep.subr.mxu0 0.0
      %549 = vmatpush1.msra.mxu0 0.0
      %550 = vmatprep.subr.mxu0 0.0
      %551 = vmatpush1.msra.mxu0 0.0
      %552 = vmatprep.mubr.f32.mxu0 0.0
      %553 = vmatmul.mubr.f32.gmra.mrb[0].mxu0 %v470
      %v554 = vpop.f32.mrb[0].mxu0
      %v555 = vadd.f32 %v456, %v554
      %v556 = vpop.f32.mrb[0].mxu0
      %v557 = vadd.f32 %v456, %v556
      %558 = vmatprep.mubr.f32.mxu0 0.0
      %559 = vmatmul.mubr.f32.gmra.mrb[0].mxu0 %v473
      %v560 = vpop.f32.mrb[0].mxu0
      %v561 = vadd.f32 %v461, %v560
      %v562 = vpop.f32.mrb[0].mxu0
      %v563 = vadd.f32 %v461, %v562
      %564 = vmatprep.mubr.f32.mxu0 0.0
      %565 = vmatmul.mubr.f32.gmra.mrb[0].mxu0 %v476
      %v566 = vpop.f32.mrb[0].mxu0
      %v567 = vadd.f32 %v466, %v566
      %v568 = vpop.f32.mrb[0].mxu0
      %v569 = vadd.f32 %v466, %v568
      %570 = vdwg.mxu0
      %571 = vmatprep.subr.mxu0 0.0
      %572 = vmatpush1.msra.mxu0 %v437
      %573 = vmatprep.subr.mxu0 0.0
      %574 = vmatpush1.msra.mxu0 %v440
      %575 = vmatprep.subr.mxu0 0.0
      %576 = vmatpush1.msra.mxu0 %v443
      %577 = vmatprep.subr.mxu0 0.0
      %578 = vmatpush1.msra.mxu0 %v446
      %579 = vmatprep.subr.mxu0 0.0
      %580 = vmatpush1.msra.mxu0 %v486
      %581 = vmatprep.subr.mxu0 0.0
      %582 = vmatpush1.msra.mxu0 0.0
      %583 = vmatprep.subr.mxu0 0.0
      %584 = vmatpush1.msra.mxu0 0.0
      %585 = vmatprep.subr.mxu0 0.0
      %586 = vmatpush1.msra.mxu0 0.0
      %587 = vmatprep.subr.mxu0 0.0
      %588 = vmatpush1.msra.mxu0 0.0
      %589 = vmatprep.subr.mxu0 0.0
      %590 = vmatpush1.msra.mxu0 0.0
      %591 = vmatprep.subr.mxu0 0.0
      %592 = vmatpush1.msra.mxu0 0.0
      %593 = vmatprep.subr.mxu0 0.0
      %594 = vmatpush1.msra.mxu0 0.0
      %595 = vmatprep.subr.mxu0 0.0
      %596 = vmatpush1.msra.mxu0 0.0
      %597 = vmatprep.subr.mxu0 0.0
      %598 = vmatpush1.msra.mxu0 0.0
      %599 = vmatprep.subr.mxu0 0.0
      %600 = vmatpush1.msra.mxu0 0.0
      %601 = vmatprep.subr.mxu0 0.0
      %602 = vmatpush1.msra.mxu0 0.0
      %603 = vmatprep.subr.mxu0 0.0
      %604 = vmatpush1.msra.mxu0 0.0
      %605 = vmatprep.subr.mxu0 0.0
      %606 = vmatpush1.msra.mxu0 0.0
      %607 = vmatprep.subr.mxu0 0.0
      %608 = vmatpush1.msra.mxu0 0.0
      %609 = vmatprep.subr.mxu0 0.0
      %610 = vmatpush1.msra.mxu0 0.0
      %611 = vmatprep.subr.mxu0 0.0
      %612 = vmatpush1.msra.mxu0 0.0
      %613 = vmatprep.subr.mxu0 0.0
      %614 = vmatpush1.msra.mxu0 0.0
      %615 = vmatprep.subr.mxu0 0.0
      %616 = vmatpush1.msra.mxu0 0.0
      %617 = vmatprep.subr.mxu0 0.0
      %618 = vmatpush1.msra.mxu0 0.0
      %619 = vmatprep.subr.mxu0 0.0
      %620 = vmatpush1.msra.mxu0 0.0
      %621 = vmatprep.subr.mxu0 0.0
      %622 = vmatpush1.msra.mxu0 0.0
      %623 = vmatprep.subr.mxu0 0.0
      %624 = vmatpush1.msra.mxu0 0.0
      %625 = vmatprep.subr.mxu0 0.0
      %626 = vmatpush1.msra.mxu0 0.0
      %627 = vmatprep.subr.mxu0 0.0
      %628 = vmatpush1.msra.mxu0 0.0
      %629 = vmatprep.subr.mxu0 0.0
      %630 = vmatpush1.msra.mxu0 0.0
      %631 = vmatprep.subr.mxu0 0.0
      %632 = vmatpush1.msra.mxu0 0.0
      %633 = vmatprep.subr.mxu0 0.0
      %634 = vmatpush1.msra.mxu0 0.0
      %635 = vmatprep.mubr.f32.mxu0 0.0
      %636 = vmatmul.mubr.f32.gmra.mrb[0].mxu0 %v470
      %v637 = vpop.f32.mrb[0].mxu0
      %v638 = vadd.f32 %v456, %v637
      %v639 = vpop.f32.mrb[0].mxu0
      %640 = vmatprep.mubr.f32.mxu0 0.0
      %641 = vmatmul.mubr.f32.gmra.mrb[0].mxu0 %v473
      %v642 = vpop.f32.mrb[0].mxu0
      %v643 = vadd.f32 %v461, %v642
      %v644 = vpop.f32.mrb[0].mxu0
      %645 = vmatprep.mubr.f32.mxu0 0.0
      %646 = vmatmul.mubr.f32.gmra.mrb[0].mxu0 %v476
      %v647 = vpop.f32.mrb[0].mxu0
      %v648 = vadd.f32 %v466, %v647
      %v649 = vpop.f32.mrb[0].mxu0
      %650 = vdwg.mxu0
      %v654 = vcombine.low %v567, %v569
      %v656 = vunpack.c.l.s4 1966171168
      %v657 = vunpack.c.0.s8 %v656
      %v658 = vlaneseq
      %v659 = vshrl.u32 %v658, 7
      %v660 = vsub.s32 %v657, %v659
      %v661 = vrot.slane %v654, %v660
      %v663 = vunpack.c.l.s4 1966171168
      %v664 = vunpack.c.0.s8 %v663
      %v665 = vlaneseq
      %v666 = vshrl.u32 %v665, 7
      %v667 = vsub.s32 %v664, %v666
      %v668 = vrot.slane %v648, %v667
      %v669 = vcombine.low %v661, %v668
      %v671 = vunpack.c.l.s4 1966171168
      %v672 = vunpack.c.0.s8 %v671
      %v673 = vlaneseq
      %v674 = vshrl.u32 %v673, 7
      %v675 = vsub.s32 %v672, %v674
      %v676 = vrot.slane %v669, %v675
      %v678 = vlaneseq
      %vm679 = vcmp.ge.s32.totalorder %v678, 0
      %vm680 = vcmp.lt.s32.totalorder %v678, 288
      %vm681 = vmand %vm679, %vm680
      %682 = vst.msk [vmem:[%s235] sm:$0x7] %vm681, %v676
      %v683 = vlaneseq
      %v684 = vand.u32 %v683, 127
      %v685 = vadd.s32 %v684, 128
      %v686 = vadd.s32 %v684, 256
      %vm687 = vcmp.lt.s32.totalorder %v684, 0
      %v688 = vsub.s32 0, %v684
      %v689 = vsel %vm687, %v688, %v684
      %v690 = vmul.u32.u64.compose %v689, 3817748708
      %v691 = vextract.low.u32 %v690
      %v692 = vextract.high.u32 %v690
      %v693 = vshrl.u32 %v692, 4
      %v694 = vmul.u32 %v693, 18
      %v695 = vsub.s32 %v689, %v694
      %v696 = vsub.s32 0, %v695
      %v697 = vsel %vm687, %v696, %v695
      %vm698 = vcmp.lt.s32.totalorder %v685, 0
      %v699 = vsub.s32 0, %v685
      %v700 = vsel %vm698, %v699, %v685
      %v701 = vmul.u32.u64.compose %v700, 3817748708
      %v702 = vextract.low.u32 %v701
      %v703 = vextract.high.u32 %v701
      %v704 = vshrl.u32 %v703, 4
      %v705 = vmul.u32 %v704, 18
      %v706 = vsub.s32 %v700, %v705
      %v707 = vsub.s32 0, %v706
      %v708 = vsel %vm698, %v707, %v706
      %vm709 = vcmp.lt.s32.totalorder %v686, 0
      %v710 = vsub.s32 0, %v686
      %v711 = vsel %vm709, %v710, %v686
      %v712 = vmul.u32.u64.compose %v711, 3817748708
      %v713 = vextract.low.u32 %v712
      %v714 = vextract.high.u32 %v712
      %v715 = vshrl.u32 %v714, 4
      %v716 = vmul.u32 %v715, 18
      %v717 = vsub.s32 %v711, %v716
      %v718 = vsub.s32 0, %v717
      %v719 = vsel %vm709, %v718, %v717
      %vm720 = vcmp.ne.s32.totalorder %v697, 0
      %vm721 = vcmp.ne.s32.totalorder %v708, 0
      %vm722 = vcmp.ne.s32.totalorder %v719, 0
      %vm723 = vcmp.lt.s32.totalorder %v697, 0
      %vm724 = vcmp.lt.s32.totalorder %v708, 0
      %vm725 = vcmp.lt.s32.totalorder %v719, 0
      %vm726 = vmand %vm723, %vm720
      %vm727 = vmand %vm724, %vm721
      %vm728 = vmand %vm725, %vm722
      %v729 = vadd.s32 %v697, 18
      %v730 = vadd.s32 %v708, 18
      %v731 = vadd.s32 %v719, 18
      %v732 = vsel %vm726, %v729, %v697
      %v733 = vsel %vm727, %v730, %v708
      %v734 = vsel %vm728, %v731, %v719
      %vm735 = vcmp.lt.s32.totalorder %v732, 16
      %vm736 = vcmp.lt.s32.totalorder %v733, 16
      %vm737 = vcmp.lt.s32.totalorder %v734, 16
      %v738 = vsel %vm735, %v555, 0.0
      %v739 = vsel %vm736, %v557, 0.0
      %v740 = vsel %vm737, %v638, 0.0
      %v741 = vsel %vm735, %v561, 0.0
      %v742 = vsel %vm736, %v563, 0.0
      %v743 = vsel %vm737, %v643, 0.0
      %v744 = vsel %vm735, %v567, 0.0
      %v745 = vsel %vm736, %v569, 0.0
      %v746 = vsel %vm737, %v648, 0.0
      %vm747 = vcmask 154624
      %748 = vst.msk [vmem:[#allocation4] sm:$0xff] %vm747, 0.0
      %749 = vst.msk [vmem:[#allocation4 + $0x18] sm:$0xff] %vm747, 0.0
      %vm750 = vcmask 147456
      %751 = vst.msk [vmem:[#allocation4 + $0x30] sm:$0x1] %vm750, 0.0
      %vm752 = vcmask 564632
      %753 = vst.msk [vmem:[#allocation4 + $0x10] sm:$0xff] %vm752, 0.0
      %754 = vst.msk [vmem:[#allocation4 + $0x28] sm:$0xff] %vm752, 0.0
      %vm755 = vcmask 557464
      %756 = vst.msk [vmem:[#allocation4 + $0x40] sm:$0x1] %vm755, 0.0
      %766 = vrot.lane.b32.xlu0 %v738, 19
      %v767 = vpop.permute.xlu0 %766
      %768 = vrot.lane.b32.xlu0 %v739, 19
      %v769 = vpop.permute.xlu0 %768
      %770 = vrot.lane.b32.xlu0 %v740, 19
      %v771 = vpop.permute.xlu0 %770
      %772 = vrot.lane.b32.xlu0 %v741, 19
      %v773 = vpop.permute.xlu0 %772
      %774 = vrot.lane.b32.xlu0 %v742, 19
      %v775 = vpop.permute.xlu0 %774
      %776 = vrot.lane.b32.xlu0 %v743, 19
      %v777 = vpop.permute.xlu0 %776
      %778 = vrot.lane.b32.xlu0 %v744, 19
      %v779 = vpop.permute.xlu0 %778
      %780 = vrot.lane.b32.xlu0 %v745, 19
      %v781 = vpop.permute.xlu0 %780
      %782 = vrot.lane.b32.xlu0 %v746, 19
      %v783 = vpop.permute.xlu0 %782
      %v784 = vsel %vm747, %v767, %v769
      %v785 = vsel %vm747, %v769, %v771
      %v786 = vsel %vm747, %v773, %v775
      %v787 = vsel %vm747, %v775, %v777
      %v788 = vsel %vm747, %v779, %v781
      %v789 = vsel %vm747, %v781, %v783
      %vm799 = vcmask 1047704
      %800 = vst.msk [vmem:[#allocation4] sm:$0xff] %vm799, %v767
      %801 = vst [vmem:[#allocation4 + $0x8] sm:$0xff] %v784
      %vm802 = vcmask 416768
      %803 = vst.msk [vmem:[#allocation4 + $0x10] sm:$0xff] %vm802, %v785
      %804 = vst.msk [vmem:[#allocation4 + $0x18] sm:$0xff] %vm799, %v773
      %805 = vst [vmem:[#allocation4 + $0x20] sm:$0xff] %v786
      %806 = vst.msk [vmem:[#allocation4 + $0x28] sm:$0xff] %vm802, %v787
      %vm807 = vcmask 1040536
      %808 = vst.msk [vmem:[#allocation4 + $0x30] sm:$0x1] %vm807, %v779
      %809 = vst [vmem:[#allocation4 + $0x38] sm:$0x1] %v788
      %vm810 = vcmask 409600
      %811 = vst.msk [vmem:[#allocation4 + $0x40] sm:$0x1] %vm810, %v789
      %v812 = vld [vmem:[#allocation4] sm:$0xff]
      %v813 = vld [vmem:[#allocation4 + $0x8] sm:$0xff]
      %v814 = vld [vmem:[#allocation4 + $0x10] sm:$0xff]
      %v815 = vld [vmem:[#allocation4 + $0x18] sm:$0xff]
      %v816 = vld [vmem:[#allocation4 + $0x20] sm:$0xff]
      %v817 = vld [vmem:[#allocation4 + $0x28] sm:$0xff]
      %v818 = vld [vmem:[#allocation4 + $0x30] sm:$0x1]
      %v819 = vld [vmem:[#allocation4 + $0x38] sm:$0x1]
      %v820 = vld [vmem:[#allocation4 + $0x40] sm:$0x1]
      %821 = vst [vmem:[#allocation5] sm:$0xff] %v812
      %822 = vst [vmem:[#allocation5 + $0x8] sm:$0xff] %v813
      %vm823 = vcmask 408576
      %824 = vst.msk [vmem:[#allocation5 + $0x10] sm:$0xff] %vm823, %v814
      %825 = vst [vmem:[#allocation5 + $0x18] sm:$0xff] %v815
      %826 = vst [vmem:[#allocation5 + $0x20] sm:$0xff] %v816
      %827 = vst.msk [vmem:[#allocation5 + $0x28] sm:$0xff] %vm823, %v817
      %828 = vst [vmem:[#allocation5 + $0x30] sm:$0x1] %v818
      %829 = vst [vmem:[#allocation5 + $0x38] sm:$0x1] %v819
      %vm830 = vcmask 401408
      %831 = vst.msk [vmem:[#allocation5 + $0x40] sm:$0x1] %vm830, %v820
      %v832 = vld [vmem:[#allocation4] sm:$0xff]
      %v833 = vld [vmem:[#allocation4 + $0x8] sm:$0xff]
      %v834 = vld [vmem:[#allocation4 + $0x10] sm:$0xff]
      %v835 = vld [vmem:[#allocation4 + $0x18] sm:$0xff]
      %v836 = vld [vmem:[#allocation4 + $0x20] sm:$0xff]
      %v837 = vld [vmem:[#allocation4 + $0x28] sm:$0xff]
      %v838 = vld [vmem:[#allocation4 + $0x30] sm:$0x1]
      %v839 = vld [vmem:[#allocation4 + $0x38] sm:$0x1]
      %v840 = vld [vmem:[#allocation4 + $0x40] sm:$0x1]
      %vm850 = vcmask 1040384
      %v851 = vrot.slane %v832, 7
      %v852 = vrot.slane %v833, 7
      %v853 = vrot.slane %v834, 7
      %v854 = vrot.slane %v835, 7
      %v855 = vsel %vm850, %v851, %v854
      %v856 = vrot.slane %v836, 7
      %v857 = vsel %vm850, %v852, %v856
      %v858 = vrot.slane %v837, 7
      %v859 = vsel %vm850, %v853, %v858
      %v860 = vrot.slane %v838, 7
      %v861 = vsel %vm850, %v854, %v860
      %v862 = vrot.slane %v839, 7
      %v863 = vsel %vm850, %v856, %v862
      %v864 = vrot.slane %v840, 7
      %v865 = vsel %vm850, %v858, %v864
      %866 = vrot.lane.b32.xlu0 %v851, 127
      %v867 = vpop.permute.xlu0 %866
      %868 = vrot.lane.b32.xlu0 %v852, 127
      %v869 = vpop.permute.xlu0 %868
      %870 = vrot.lane.b32.xlu0 %v853, 127
      %v871 = vpop.permute.xlu0 %870
      %872 = vrot.lane.b32.xlu0 %v855, 127
      %v873 = vpop.permute.xlu0 %872
      %874 = vrot.lane.b32.xlu0 %v857, 127
      %v875 = vpop.permute.xlu0 %874
      %876 = vrot.lane.b32.xlu0 %v859, 127
      %v877 = vpop.permute.xlu0 %876
      %878 = vrot.lane.b32.xlu0 %v861, 127
      %v879 = vpop.permute.xlu0 %878
      %880 = vrot.lane.b32.xlu0 %v863, 127
      %v881 = vpop.permute.xlu0 %880
      %882 = vrot.lane.b32.xlu0 %v865, 127
      %v883 = vpop.permute.xlu0 %882
      %v884 = vsel %vm279, %v867, %v869
      %v885 = vsel %vm279, %v869, %v871
      %v886 = vsel %vm279, %v873, %v875
      %v887 = vsel %vm279, %v875, %v877
      %v888 = vsel %vm279, %v879, %v881
      %v889 = vsel %vm279, %v881, %v883
      %899 = vst [vmem:[#allocation5 + $0x30] sm:$0xfe] %v884
      %900 = vst [vmem:[#allocation5 + $0x38] sm:$0xfe] %v885
      %vm901 = vcmask 408577
      %902 = vst.msk [vmem:[#allocation5 + $0x40] sm:$0xfe] %vm901, %v871
      %903 = vst [vmem:[#allocation5 + $0x48] sm:$0xff] %v886
      %904 = vst [vmem:[#allocation5 + $0x50] sm:$0xff] %v887
      %905 = vst.msk [vmem:[#allocation5 + $0x58] sm:$0xff] %vm823, %v877
      %906 = vst [vmem:[#allocation5 + $0x60] sm:$0x3] %v888
      %907 = vst [vmem:[#allocation5 + $0x68] sm:$0x3] %v889
      %vm908 = vcmask 402432
      %909 = vst.msk [vmem:[#allocation5 + $0x70] sm:$0x3] %vm908, %v883
      %v910 = vld [vmem:[#allocation4] sm:$0xff]
      %v911 = vld [vmem:[#allocation4 + $0x8] sm:$0xff]
      %v912 = vld [vmem:[#allocation4 + $0x10] sm:$0xff]
      %v913 = vld [vmem:[#allocation4 + $0x18] sm:$0xff]
      %v914 = vld [vmem:[#allocation4 + $0x20] sm:$0xff]
      %v915 = vld [vmem:[#allocation4 + $0x28] sm:$0xff]
      %v916 = vld [vmem:[#allocation4 + $0x30] sm:$0x1]
      %v917 = vld [vmem:[#allocation4 + $0x38] sm:$0x1]
      %v918 = vld [vmem:[#allocation4 + $0x40] sm:$0x1]
      %vm928 = vcmask 1041408
      %v929 = vrot.slane %v910, 6
      %v930 = vrot.slane %v911, 6
      %v931 = vrot.slane %v912, 6
      %v932 = vrot.slane %v913, 6
      %v933 = vsel %vm928, %v929, %v932
      %v934 = vrot.slane %v914, 6
      %v935 = vsel %vm928, %v930, %v934
      %v936 = vrot.slane %v915, 6
      %v937 = vsel %vm928, %v931, %v936
      %v938 = vrot.slane %v916, 6
      %v939 = vsel %vm928, %v932, %v938
      %v940 = vrot.slane %v917, 6
      %v941 = vsel %vm928, %v934, %v940
      %v942 = vrot.slane %v918, 6
      %v943 = vsel %vm928, %v936, %v942
      %944 = vrot.lane.b32.xlu0 %v929, 110
      %v945 = vpop.permute.xlu0 %944
      %946 = vrot.lane.b32.xlu0 %v930, 110
      %v947 = vpop.permute.xlu0 %946
      %948 = vrot.lane.b32.xlu0 %v931, 110
      %v949 = vpop.permute.xlu0 %948
      %950 = vrot.lane.b32.xlu0 %v933, 110
      %v951 = vpop.permute.xlu0 %950
      %952 = vrot.lane.b32.xlu0 %v935, 110
      %v953 = vpop.permute.xlu0 %952
      %954 = vrot.lane.b32.xlu0 %v937, 110
      %v955 = vpop.permute.xlu0 %954
      %956 = vrot.lane.b32.xlu0 %v939, 110
      %v957 = vpop.permute.xlu0 %956
      %958 = vrot.lane.b32.xlu0 %v941, 110
      %v959 = vpop.permute.xlu0 %958
      %960 = vrot.lane.b32.xlu0 %v943, 110
      %v961 = vpop.permute.xlu0 %960
      %v962 = vsel %vm321, %v945, %v947
      %v963 = vsel %vm321, %v947, %v949
      %v964 = vsel %vm321, %v951, %v953
      %v965 = vsel %vm321, %v953, %v955
      %v966 = vsel %vm321, %v957, %v959
      %v967 = vsel %vm321, %v959, %v961
      %977 = vst [vmem:[#allocation5 + $0x60] sm:$0xfc] %v962
      %978 = vst [vmem:[#allocation5 + $0x68] sm:$0xfc] %v963
      %vm979 = vcmask 408578
      %980 = vst.msk [vmem:[#allocation5 + $0x70] sm:$0xfc] %vm979, %v949
      %981 = vst [vmem:[#allocation5 + $0x78] sm:$0xff] %v964
      %982 = vst [vmem:[#allocation5 + $0x80] sm:$0xff] %v965
      %983 = vst.msk [vmem:[#allocation5 + $0x88] sm:$0xff] %vm823, %v955
      %984 = vst [vmem:[#allocation5 + $0x90] sm:$0x7] %v966
      %985 = vst [vmem:[#allocation5 + $0x98] sm:$0x7] %v967
      %vm986 = vcmask 403456
      %987 = vst.msk [vmem:[#allocation5 + $0xa0] sm:$0x7] %vm986, %v961
      %v988 = vld [vmem:[#allocation4] sm:$0xff]
      %v989 = vld [vmem:[#allocation4 + $0x8] sm:$0xff]
      %v990 = vld [vmem:[#allocation4 + $0x10] sm:$0xff]
      %v991 = vld [vmem:[#allocation4 + $0x18] sm:$0xff]
      %v992 = vld [vmem:[#allocation4 + $0x20] sm:$0xff]
      %v993 = vld [vmem:[#allocation4 + $0x28] sm:$0xff]
      %v994 = vld [vmem:[#allocation4 + $0x30] sm:$0x1]
      %v995 = vld [vmem:[#allocation4 + $0x38] sm:$0x1]
      %v996 = vld [vmem:[#allocation4 + $0x40] sm:$0x1]
      %vm1006 = vcmask 1042432
      %v1007 = vrot.slane %v988, 5
      %v1008 = vrot.slane %v989, 5
      %v1009 = vrot.slane %v990, 5
      %v1010 = vrot.slane %v991, 5
      %v1011 = vsel %vm1006, %v1007, %v1010
      %v1012 = vrot.slane %v992, 5
      %v1013 = vsel %vm1006, %v1008, %v1012
      %v1014 = vrot.slane %v993, 5
      %v1015 = vsel %vm1006, %v1009, %v1014
      %v1016 = vrot.slane %v994, 5
      %v1017 = vsel %vm1006, %v1010, %v1016
      %v1018 = vrot.slane %v995, 5
      %v1019 = vsel %vm1006, %v1012, %v1018
      %v1020 = vrot.slane %v996, 5
      %v1021 = vsel %vm1006, %v1014, %v1020
      %1022 = vrot.lane.b32.xlu0 %v1007, 109
      %v1023 = vpop.permute.xlu0 %1022
      %1024 = vrot.lane.b32.xlu0 %v1008, 109
      %v1025 = vpop.permute.xlu0 %1024
      %1026 = vrot.lane.b32.xlu0 %v1009, 109
      %v1027 = vpop.permute.xlu0 %1026
      %1028 = vrot.lane.b32.xlu0 %v1011, 109
      %v1029 = vpop.permute.xlu0 %1028
      %1030 = vrot.lane.b32.xlu0 %v1013, 109
      %v1031 = vpop.permute.xlu0 %1030
      %1032 = vrot.lane.b32.xlu0 %v1015, 109
      %v1033 = vpop.permute.xlu0 %1032
      %1034 = vrot.lane.b32.xlu0 %v1017, 109
      %v1035 = vpop.permute.xlu0 %1034
      %1036 = vrot.lane.b32.xlu0 %v1019, 109
      %v1037 = vpop.permute.xlu0 %1036
      %1038 = vrot.lane.b32.xlu0 %v1021, 109
      %v1039 = vpop.permute.xlu0 %1038
      %v1040 = vsel %vm341, %v1023, %v1025
      %v1041 = vsel %vm341, %v1025, %v1027
      %v1042 = vsel %vm341, %v1029, %v1031
      %v1043 = vsel %vm341, %v1031, %v1033
      %v1044 = vsel %vm341, %v1035, %v1037
      %v1045 = vsel %vm341, %v1037, %v1039
      %1055 = vst [vmem:[#allocation5 + $0x90] sm:$0xf8] %v1040
      %1056 = vst [vmem:[#allocation5 + $0x98] sm:$0xf8] %v1041
      %vm1057 = vcmask 408579
      %1058 = vst.msk [vmem:[#allocation5 + $0xa0] sm:$0xf8] %vm1057, %v1027
      %1059 = vst [vmem:[#allocation5 + $0xa8] sm:$0xff] %v1042
      %1060 = vst [vmem:[#allocation5 + $0xb0] sm:$0xff] %v1043
      %1061 = vst.msk [vmem:[#allocation5 + $0xb8] sm:$0xff] %vm823, %v1033
      %1062 = vst [vmem:[#allocation5 + $0xc0] sm:$0xf] %v1044
      %1063 = vst [vmem:[#allocation5 + $0xc8] sm:$0xf] %v1045
      %vm1064 = vcmask 404480
      %1065 = vst.msk [vmem:[#allocation5 + $0xd0] sm:$0xf] %vm1064, %v1039
      %v1066 = vld [vmem:[%s3] sm:$0xff]
      %v1067 = vld [vmem:[%s3 + $0x8] sm:$0xff]
      %v1068 = vld [vmem:[%s3 + $0x10] sm:$0xff]
      %v1069 = vld [vmem:[%s3 + $0x18] sm:$0xff]
      %v1070 = vld [vmem:[%s3 + $0x20] sm:$0xff]
      %v1071 = vld [vmem:[%s3 + $0x28] sm:$0xff]
      %v1072 = vld [vmem:[%s3 + $0x30] sm:$0xff]
      %v1073 = vld [vmem:[%s3 + $0x38] sm:$0xff]
      %v1074 = vld [vmem:[%s3 + $0x40] sm:$0xf]
      %v1075 = vld [vmem:[#allocation5] sm:$0xff]
      %v1076 = vld [vmem:[#allocation5 + $0x8] sm:$0xff]
      %v1077 = vld [vmem:[#allocation5 + $0x10] sm:$0xff]
      %v1078 = vld [vmem:[#allocation5 + $0x18] sm:$0xff]
      %v1079 = vld [vmem:[#allocation5 + $0x20] sm:$0xff]
      %v1080 = vld [vmem:[#allocation5 + $0x28] sm:$0xff]
      %v1081 = vld [vmem:[#allocation5 + $0x30] sm:$0xff]
      %v1082 = vld [vmem:[#allocation5 + $0x38] sm:$0xff]
      %v1083 = vld [vmem:[#allocation5 + $0x40] sm:$0xff]
      %v1084 = vld [vmem:[#allocation5 + $0x48] sm:$0xff]
      %v1085 = vld [vmem:[#allocation5 + $0x50] sm:$0xff]
      %v1086 = vld [vmem:[#allocation5 + $0x58] sm:$0xff]
      %v1087 = vld [vmem:[#allocation5 + $0x60] sm:$0xff]
      %v1088 = vld [vmem:[#allocation5 + $0x68] sm:$0xff]
      %v1089 = vld [vmem:[#allocation5 + $0x70] sm:$0xff]
      %v1090 = vld [vmem:[#allocation5 + $0x78] sm:$0xff]
      %v1091 = vld [vmem:[#allocation5 + $0x80] sm:$0xff]
      %v1092 = vld [vmem:[#allocation5 + $0x88] sm:$0xff]
      %v1093 = vld [vmem:[#allocation5 + $0x90] sm:$0xff]
      %v1094 = vld [vmem:[#allocation5 + $0x98] sm:$0xff]
      %v1095 = vld [vmem:[#allocation5 + $0xa0] sm:$0xff]
      %v1096 = vld [vmem:[#allocation5 + $0xa8] sm:$0xff]
      %v1097 = vld [vmem:[#allocation5 + $0xb0] sm:$0xff]
      %v1098 = vld [vmem:[#allocation5 + $0xb8] sm:$0xff]
      %v1099 = vld [vmem:[#allocation5 + $0xc0] sm:$0xf]
      %v1100 = vld [vmem:[#allocation5 + $0xc8] sm:$0xf]
      %v1101 = vld [vmem:[#allocation5 + $0xd0] sm:$0xf]
      %vm1102 = vcmask 556032
      %v1104 = vsel %vm1102, %v1066, 0
      %v1107 = vsel %vm1102, %v1067, 0
      %v1110 = vsel %vm1102, %v1068, 0
      %v1113 = vsel %vm1102, %v1069, 0
      %v1116 = vsel %vm1102, %v1070, 0
      %v1119 = vsel %vm1102, %v1071, 0
      %v1122 = vsel %vm1102, %v1072, 0
      %v1125 = vsel %vm1102, %v1073, 0
      %v1128 = vsel %vm1102, %v1074, 0
      %v1131 = vsel %vm478, %v1099, 0
      %v1134 = vsel %vm478, %v1100, 0
      %v1137 = vsel %vm478, %v1101, 0
      %1139 = vmatprep.subr.mxu0 %v1076
      %1140 = vmatpush1.msra.mxu0 %v1075
      %1141 = vmatprep.subr.mxu0 %v1079
      %1142 = vmatpush1.msra.mxu0 %v1078
      %1143 = vmatprep.subr.mxu0 %v1082
      %1144 = vmatpush1.msra.mxu0 %v1081
      %1145 = vmatprep.subr.mxu0 %v1085
      %1146 = vmatpush1.msra.mxu0 %v1084
      %1147 = vmatprep.subr.mxu0 %v1088
      %1148 = vmatpush1.msra.mxu0 %v1087
      %1149 = vmatprep.subr.mxu0 %v1091
      %1150 = vmatpush1.msra.mxu0 %v1090
      %1151 = vmatprep.subr.mxu0 %v1094
      %1152 = vmatpush1.msra.mxu0 %v1093
      %1153 = vmatprep.subr.mxu0 %v1097
      %1154 = vmatpush1.msra.mxu0 %v1096
      %1155 = vmatprep.subr.mxu0 %v1134
      %1156 = vmatpush1.msra.mxu0 %v1131
      %1157 = vmatprep.subr.mxu0 0.0
      %1158 = vmatpush1.msra.mxu0 0.0
      %1159 = vmatprep.subr.mxu0 0.0
      %1160 = vmatpush1.msra.mxu0 0.0
      %1161 = vmatprep.subr.mxu0 0.0
      %1162 = vmatpush1.msra.mxu0 0.0
      %1163 = vmatprep.subr.mxu0 0.0
      %1164 = vmatpush1.msra.mxu0 0.0
      %1165 = vmatprep.subr.mxu0 0.0
      %1166 = vmatpush1.msra.mxu0 0.0
      %1167 = vmatprep.subr.mxu0 0.0
      %1168 = vmatpush1.msra.mxu0 0.0
      %1169 = vmatprep.subr.mxu0 0.0
      %1170 = vmatpush1.msra.mxu0 0.0
      %1171 = vmatprep.subr.mxu0 0.0
      %1172 = vmatpush1.msra.mxu0 0.0
      %1173 = vmatprep.subr.mxu0 0.0
      %1174 = vmatpush1.msra.mxu0 0.0
      %1175 = vmatprep.subr.mxu0 0.0
      %1176 = vmatpush1.msra.mxu0 0.0
      %1177 = vmatprep.subr.mxu0 0.0
      %1178 = vmatpush1.msra.mxu0 0.0
      %1179 = vmatprep.subr.mxu0 0.0
      %1180 = vmatpush1.msra.mxu0 0.0
      %1181 = vmatprep.subr.mxu0 0.0
      %1182 = vmatpush1.msra.mxu0 0.0
      %1183 = vmatprep.subr.mxu0 0.0
      %1184 = vmatpush1.msra.mxu0 0.0
      %1185 = vmatprep.subr.mxu0 0.0
      %1186 = vmatpush1.msra.mxu0 0.0
      %1187 = vmatprep.subr.mxu0 0.0
      %1188 = vmatpush1.msra.mxu0 0.0
      %1189 = vmatprep.subr.mxu0 0.0
      %1190 = vmatpush1.msra.mxu0 0.0
      %1191 = vmatprep.subr.mxu0 0.0
      %1192 = vmatpush1.msra.mxu0 0.0
      %1193 = vmatprep.subr.mxu0 0.0
      %1194 = vmatpush1.msra.mxu0 0.0
      %1195 = vmatprep.subr.mxu0 0.0
      %1196 = vmatpush1.msra.mxu0 0.0
      %1197 = vmatprep.subr.mxu0 0.0
      %1198 = vmatpush1.msra.mxu0 0.0
      %1199 = vmatprep.subr.mxu0 0.0
      %1200 = vmatpush1.msra.mxu0 0.0
      %1201 = vmatprep.subr.mxu0 0.0
      %1202 = vmatpush1.msra.mxu0 0.0
      %1203 = vmatprep.mubr.f32.mxu0 0.0
      %1204 = vmatmul.mubr.f32.gmra.mrb[0].mxu0 %v1104
      %v1205 = vpop.f32.mrb[0].mxu0
      %v1206 = vadd.f32 0.0, %v1205
      %v1207 = vpop.f32.mrb[0].mxu0
      %v1208 = vadd.f32 0.0, %v1207
      %1209 = vmatprep.mubr.f32.mxu0 0.0
      %1210 = vmatmul.mubr.f32.gmra.mrb[0].mxu0 %v1107
      %v1211 = vpop.f32.mrb[0].mxu0
      %v1212 = vadd.f32 0.0, %v1211
      %v1213 = vpop.f32.mrb[0].mxu0
      %v1214 = vadd.f32 0.0, %v1213
      %1215 = vmatprep.mubr.f32.mxu0 0.0
      %1216 = vmatmul.mubr.f32.gmra.mrb[0].mxu0 %v1110
      %v1217 = vpop.f32.mrb[0].mxu0
      %v1218 = vadd.f32 0.0, %v1217
      %v1219 = vpop.f32.mrb[0].mxu0
      %v1220 = vadd.f32 0.0, %v1219
      %1221 = vmatprep.mubr.f32.mxu0 0.0
      %1222 = vmatmul.mubr.f32.gmra.mrb[0].mxu0 %v1113
      %v1223 = vpop.f32.mrb[0].mxu0
      %v1224 = vadd.f32 0.0, %v1223
      %v1225 = vpop.f32.mrb[0].mxu0
      %v1226 = vadd.f32 0.0, %v1225
      %1227 = vmatprep.mubr.f32.mxu0 0.0
      %1228 = vmatmul.mubr.f32.gmra.mrb[0].mxu0 %v1116
      %v1229 = vpop.f32.mrb[0].mxu0
      %v1230 = vadd.f32 0.0, %v1229
      %v1231 = vpop.f32.mrb[0].mxu0
      %v1232 = vadd.f32 0.0, %v1231
      %1233 = vmatprep.mubr.f32.mxu0 0.0
      %1234 = vmatmul.mubr.f32.gmra.mrb[0].mxu0 %v1119
      %v1235 = vpop.f32.mrb[0].mxu0
      %v1236 = vadd.f32 0.0, %v1235
      %v1237 = vpop.f32.mrb[0].mxu0
      %v1238 = vadd.f32 0.0, %v1237
      %1239 = vmatprep.mubr.f32.mxu0 0.0
      %1240 = vmatmul.mubr.f32.gmra.mrb[0].mxu0 %v1122
      %v1241 = vpop.f32.mrb[0].mxu0
      %v1242 = vadd.f32 0.0, %v1241
      %v1243 = vpop.f32.mrb[0].mxu0
      %v1244 = vadd.f32 0.0, %v1243
      %1245 = vmatprep.mubr.f32.mxu0 0.0
      %1246 = vmatmul.mubr.f32.gmra.mrb[0].mxu0 %v1125
      %v1247 = vpop.f32.mrb[0].mxu0
      %v1248 = vadd.f32 0.0, %v1247
      %v1249 = vpop.f32.mrb[0].mxu0
      %v1250 = vadd.f32 0.0, %v1249
      %1251 = vmatprep.mubr.f32.mxu0 0.0
      %1252 = vmatmul.mubr.f32.gmra.mrb[0].mxu0 %v1128
      %v1253 = vpop.f32.mrb[0].mxu0
      %v1254 = vadd.f32 0.0, %v1253
      %v1255 = vpop.f32.mrb[0].mxu0
      %v1256 = vadd.f32 0.0, %v1255
      %1257 = vdwg.mxu0
      %1258 = vmatprep.subr.mxu0 0.0
      %1259 = vmatpush1.msra.mxu0 %v1077
      %1260 = vmatprep.subr.mxu0 0.0
      %1261 = vmatpush1.msra.mxu0 %v1080
      %1262 = vmatprep.subr.mxu0 0.0
      %1263 = vmatpush1.msra.mxu0 %v1083
      %1264 = vmatprep.subr.mxu0 0.0
      %1265 = vmatpush1.msra.mxu0 %v1086
      %1266 = vmatprep.subr.mxu0 0.0
      %1267 = vmatpush1.msra.mxu0 %v1089
      %1268 = vmatprep.subr.mxu0 0.0
      %1269 = vmatpush1.msra.mxu0 %v1092
      %1270 = vmatprep.subr.mxu0 0.0
      %1271 = vmatpush1.msra.mxu0 %v1095
      %1272 = vmatprep.subr.mxu0 0.0
      %1273 = vmatpush1.msra.mxu0 %v1098
      %1274 = vmatprep.subr.mxu0 0.0
      %1275 = vmatpush1.msra.mxu0 %v1137
      %1276 = vmatprep.subr.mxu0 0.0
      %1277 = vmatpush1.msra.mxu0 0.0
      %1278 = vmatprep.subr.mxu0 0.0
      %1279 = vmatpush1.msra.mxu0 0.0
      %1280 = vmatprep.subr.mxu0 0.0
      %1281 = vmatpush1.msra.mxu0 0.0
      %1282 = vmatprep.subr.mxu0 0.0
      %1283 = vmatpush1.msra.mxu0 0.0
      %1284 = vmatprep.subr.mxu0 0.0
      %1285 = vmatpush1.msra.mxu0 0.0
      %1286 = vmatprep.subr.mxu0 0.0
      %1287 = vmatpush1.msra.mxu0 0.0
      %1288 = vmatprep.subr.mxu0 0.0
      %1289 = vmatpush1.msra.mxu0 0.0
      %1290 = vmatprep.subr.mxu0 0.0
      %1291 = vmatpush1.msra.mxu0 0.0
      %1292 = vmatprep.subr.mxu0 0.0
      %1293 = vmatpush1.msra.mxu0 0.0
      %1294 = vmatprep.subr.mxu0 0.0
      %1295 = vmatpush1.msra.mxu0 0.0
      %1296 = vmatprep.subr.mxu0 0.0
      %1297 = vmatpush1.msra.mxu0 0.0
      %1298 = vmatprep.subr.mxu0 0.0
      %1299 = vmatpush1.msra.mxu0 0.0
      %1300 = vmatprep.subr.mxu0 0.0
      %1301 = vmatpush1.msra.mxu0 0.0
      %1302 = vmatprep.subr.mxu0 0.0
      %1303 = vmatpush1.msra.mxu0 0.0
      %1304 = vmatprep.subr.mxu0 0.0
      %1305 = vmatpush1.msra.mxu0 0.0
      %1306 = vmatprep.subr.mxu0 0.0
      %1307 = vmatpush1.msra.mxu0 0.0
      %1308 = vmatprep.subr.mxu0 0.0
      %1309 = vmatpush1.msra.mxu0 0.0
      %1310 = vmatprep.subr.mxu0 0.0
      %1311 = vmatpush1.msra.mxu0 0.0
      %1312 = vmatprep.subr.mxu0 0.0
      %1313 = vmatpush1.msra.mxu0 0.0
      %1314 = vmatprep.subr.mxu0 0.0
      %1315 = vmatpush1.msra.mxu0 0.0
      %1316 = vmatprep.subr.mxu0 0.0
      %1317 = vmatpush1.msra.mxu0 0.0
      %1318 = vmatprep.subr.mxu0 0.0
      %1319 = vmatpush1.msra.mxu0 0.0
      %1320 = vmatprep.subr.mxu0 0.0
      %1321 = vmatpush1.msra.mxu0 0.0
      %1322 = vmatprep.mubr.f32.mxu0 0.0
      %1323 = vmatmul.mubr.f32.gmra.mrb[0].mxu0 %v1104
      %v1324 = vpop.f32.mrb[0].mxu0
      %v1325 = vadd.f32 0.0, %v1324
      %v1326 = vpop.f32.mrb[0].mxu0
      %1327 = vmatprep.mubr.f32.mxu0 0.0
      %1328 = vmatmul.mubr.f32.gmra.mrb[0].mxu0 %v1107
      %v1329 = vpop.f32.mrb[0].mxu0
      %v1330 = vadd.f32 0.0, %v1329
      %v1331 = vpop.f32.mrb[0].mxu0
      %1332 = vmatprep.mubr.f32.mxu0 0.0
      %1333 = vmatmul.mubr.f32.gmra.mrb[0].mxu0 %v1110
      %v1334 = vpop.f32.mrb[0].mxu0
      %v1335 = vadd.f32 0.0, %v1334
      %v1336 = vpop.f32.mrb[0].mxu0
      %1337 = vmatprep.mubr.f32.mxu0 0.0
      %1338 = vmatmul.mubr.f32.gmra.mrb[0].mxu0 %v1113
      %v1339 = vpop.f32.mrb[0].mxu0
      %v1340 = vadd.f32 0.0, %v1339
      %v1341 = vpop.f32.mrb[0].mxu0
      %1342 = vmatprep.mubr.f32.mxu0 0.0
      %1343 = vmatmul.mubr.f32.gmra.mrb[0].mxu0 %v1116
      %v1344 = vpop.f32.mrb[0].mxu0
      %v1345 = vadd.f32 0.0, %v1344
      %v1346 = vpop.f32.mrb[0].mxu0
      %1347 = vmatprep.mubr.f32.mxu0 0.0
      %1348 = vmatmul.mubr.f32.gmra.mrb[0].mxu0 %v1119
      %v1349 = vpop.f32.mrb[0].mxu0
      %v1350 = vadd.f32 0.0, %v1349
      %v1351 = vpop.f32.mrb[0].mxu0
      %1352 = vmatprep.mubr.f32.mxu0 0.0
      %1353 = vmatmul.mubr.f32.gmra.mrb[0].mxu0 %v1122
      %v1354 = vpop.f32.mrb[0].mxu0
      %v1355 = vadd.f32 0.0, %v1354
      %v1356 = vpop.f32.mrb[0].mxu0
      %1357 = vmatprep.mubr.f32.mxu0 0.0
      %1358 = vmatmul.mubr.f32.gmra.mrb[0].mxu0 %v1125
      %v1359 = vpop.f32.mrb[0].mxu0
      %v1360 = vadd.f32 0.0, %v1359
      %v1361 = vpop.f32.mrb[0].mxu0
      %1362 = vmatprep.mubr.f32.mxu0 0.0
      %1363 = vmatmul.mubr.f32.gmra.mrb[0].mxu0 %v1128
      %v1364 = vpop.f32.mrb[0].mxu0
      %v1365 = vadd.f32 0.0, %v1364
      %v1366 = vpop.f32.mrb[0].mxu0
      %1367 = vdwg.mxu0
      %1368 = vst [vmem:[%s231] sm:$0xff] %v1206
      %1369 = vst [vmem:[%s231 + $0x8] sm:$0xff] %v1208
      %1370 = vst.msk [vmem:[%s231 + $0x10] sm:$0xff] %vm823, %v1325
      %1371 = vst [vmem:[%s231 + $0x18] sm:$0xff] %v1212
      %1372 = vst [vmem:[%s231 + $0x20] sm:$0xff] %v1214
      %1373 = vst.msk [vmem:[%s231 + $0x28] sm:$0xff] %vm823, %v1330
      %1374 = vst [vmem:[%s231 + $0x30] sm:$0xff] %v1218
      %1375 = vst [vmem:[%s231 + $0x38] sm:$0xff] %v1220
      %1376 = vst.msk [vmem:[%s231 + $0x40] sm:$0xff] %vm823, %v1335
      %1377 = vst [vmem:[%s231 + $0x48] sm:$0xff] %v1224
      %1378 = vst [vmem:[%s231 + $0x50] sm:$0xff] %v1226
      %1379 = vst.msk [vmem:[%s231 + $0x58] sm:$0xff] %vm823, %v1340
      %1380 = vst [vmem:[%s231 + $0x60] sm:$0xff] %v1230
      %1381 = vst [vmem:[%s231 + $0x68] sm:$0xff] %v1232
      %1382 = vst.msk [vmem:[%s231 + $0x70] sm:$0xff] %vm823, %v1345
      %1383 = vst [vmem:[%s231 + $0x78] sm:$0xff] %v1236
      %1384 = vst [vmem:[%s231 + $0x80] sm:$0xff] %v1238
      %1385 = vst.msk [vmem:[%s231 + $0x88] sm:$0xff] %vm823, %v1350
      %1386 = vst [vmem:[%s231 + $0x90] sm:$0xff] %v1242
      %1387 = vst [vmem:[%s231 + $0x98] sm:$0xff] %v1244
      %1388 = vst.msk [vmem:[%s231 + $0xa0] sm:$0xff] %vm823, %v1355
      %1389 = vst [vmem:[%s231 + $0xa8] sm:$0xff] %v1248
      %1390 = vst [vmem:[%s231 + $0xb0] sm:$0xff] %v1250
      %1391 = vst.msk [vmem:[%s231 + $0xb8] sm:$0xff] %vm823, %v1360
      %1392 = vst [vmem:[%s231 + $0xc0] sm:$0xf] %v1254
      %1393 = vst [vmem:[%s231 + $0xc8] sm:$0xf] %v1256
      %1394 = vst.msk [vmem:[%s231 + $0xd0] sm:$0xf] %vm1064, %v1365
      %p1395 = scmp.lt.s32.totalorder %s17, 1
      %s1396 = scalar_select %p1395, %s17, 1
      %s1397 = smul.addr %s1396, 27
      %s1398 = smul.addr %s1397, 8
      %s1399 = scalar_lea.vmem %s4, %s1398
      %p1400 = scmp.lt.s32.totalorder %s17, 1
      %s1401 = scalar_select %p1400, %s17, 1
      %s1402 = smul.addr %s1401, 3
      %s1403 = scalar_lea.vmem %s5, %s1402
      // Predicated region
      $region37: #{_lambda_.1} parent=35 // pred_check
        %p1404 = pneg %p124
      $region38: #{_lambda_.1} parent=35 // pred_check_branch
        %1406 = sbr.rel (%p1404) target = $region40
      $region39: #{_lambda_.1} parent=35 // pred_region
        _
      $region40: #{_lambda_.1} parent=35 // pred_fallthru
        _
      // Predicated region
      $region41: #{_lambda_.1} parent=35 // pred_check
        %p1407 = pneg %p150
      $region42: #{_lambda_.1} parent=35 // pred_check_branch
        %1409 = sbr.rel (%p1407) target = $region44
      $region43: #{_lambda_.1} parent=35 // pred_region
        _
      $region44: #{_lambda_.1} parent=35 // pred_fallthru
        _
    $region36: #{_lambda_.1} parent=5 // pred_fallthru
      _
    %p1410 = scmp.le.s32.totalorder 2, %s12
    // Predicated region
    $region45: #{_lambda_.1} parent=5 // pred_check
      %p1411 = pneg %p1410
    $region46: #{_lambda_.1} parent=5 // pred_check_branch
      %1413 = sbr.rel (%p1411) target = $region48
    $region47: #{_lambda_.1} parent=5 // pred_region
      %s1414 = ssub.s32 %s12, 2
      // Predicated region
      $region49: #{_lambda_.1} parent=47 // pred_check
        %p1415 = pneg %p130
      $region50: #{_lambda_.1} parent=47 // pred_check_branch
        %1417 = sbr.rel (%p1415) target = $region52
      $region51: #{_lambda_.1} parent=47 // pred_region
        %p1418 = scmp.lt.s32.totalorder %s18, 1
        %s1419 = scalar_select %p1418, %s18, 1
        %s1420 = smul.addr %s1419, 27
        %s1421 = smul.addr %s1420, 8
        %s1422 = scalar_lea.vmem %s4, %s1421
      $region52: #{_lambda_.1} parent=47 // pred_fallthru
        _
      // Predicated region
      $region53: #{_lambda_.1} parent=47 // pred_check
        %p1423 = pneg %p156
      $region54: #{_lambda_.1} parent=47 // pred_check_branch
        %1425 = sbr.rel (%p1423) target = $region56
      $region55: #{_lambda_.1} parent=47 // pred_region
        %p1426 = scmp.lt.s32.totalorder %s18, 1
        %s1427 = scalar_select %p1426, %s18, 1
        %s1428 = smul.addr %s1427, 3
        %s1429 = scalar_lea.vmem %s5, %s1428
      $region56: #{_lambda_.1} parent=47 // pred_fallthru
        _
    $region48: #{_lambda_.1} parent=5 // pred_fallthru
      _
  $region6: #{_lambda_.1} parent=0 // loop_footer
    %s16 = sadd.s32 1, %s12
  $region7: #{_lambda_.1} parent=0 // loop_footer_branch
    %11 = sbr.rel target = $region3
  $region8: #{_lambda_.1} parent=0 // loop_exit
    _

</llo_original>
